<compile_context>
chip_gen: v7x
topology: tpu7x:2x2x1
jax: 0.10.0
libtpu: 0.0.40
codegen_flags: <defaults>
</compile_context>

<pallas_src>
import functools
import math

import numpy as np
import jax
import jax.numpy as jnp
from jax.experimental import pallas as pl
from jax.experimental.pallas import tpu as pltpu


# ----------------------------- constant tables ------------------------------
def _rope_tables(n_seq, d):
    """t_cos / t_sin exactly as built by apply_rotary_position_encoding."""
    j = np.arange(n_seq, dtype=np.float64)[:, None]
    i = np.arange(d // 2, dtype=np.float64)[None, :]
    theta = np.power(10000.0, -2.0 * i / d)          # (1, d//2)
    ang = theta * j                                   # (n_seq, d//2)
    t_cos = np.repeat(np.cos(ang), 2, axis=1)                              # [c,c,...]
    t_sin = np.stack([np.sin(ang), -np.sin(ang)], axis=-1).reshape(n_seq, d)  # [s,-s,...]
    return jnp.asarray(t_cos, jnp.float32), jnp.asarray(t_sin, jnp.float32)


def _swap_perm_matrix(d):
    """DxD permutation P with (x @ P) == swap_adjacent_last_dim(x)."""
    idx = np.arange(d).reshape(d // 2, 2)[:, ::-1].reshape(d)   # [1,0,3,2,...]
    p = np.zeros((d, d), dtype=np.float32)
    p[idx, np.arange(d)] = 1.0
    return jnp.asarray(p)


# --------------------------------- kernel -----------------------------------
def _mha_kernel(q_ref, k_ref, v_ref, wq_ref, wk_ref, wv_ref, wo_ref, bo_ref,
                perm_ref, cos_ref, sin_ref, o_ref, *, h, d_k):
    f32 = jnp.float32

    q = q_ref[0].astype(f32)          # (S, D)
    k = k_ref[0].astype(f32)
    v = v_ref[0].astype(f32)

    # --- Q/K/V projections (weights pre-transposed to (D_in, D_out)) ---
    qp = jnp.dot(q, wq_ref[...].astype(f32), preferred_element_type=f32)
    kp = jnp.dot(k, wk_ref[...].astype(f32), preferred_element_type=f32)
    vp = jnp.dot(v, wv_ref[...].astype(f32), preferred_element_type=f32)

    # --- interleaved RoPE: x*cos + swap_adjacent(x)*sin ---
    # swap_adjacent as a constant-permutation matmul (MXU; VPU/XLU stay free).
    cos = cos_ref[...]
    sin = sin_ref[...]
    perm = perm_ref[...]
    qr = qp * cos + jnp.dot(qp, perm, preferred_element_type=f32) * sin
    kr = kp * cos + jnp.dot(kp, perm, preferred_element_type=f32) * sin

    scale = 1.0 / math.sqrt(d_k)
    bo = bo_ref[...].astype(f32)                  # (1, D)
    acc = jnp.zeros(qp.shape, dtype=f32)          # (S, D) output-proj accumulator

    # --- per-head attention (h small & static -> fully unrolled) ---
    for head in range(h):
        sl = slice(head * d_k, (head + 1) * d_k)
        qh = qr[:, sl]                            # (S, d_k)
        kh = kr[:, sl]
        vh = vp[:, sl]
        s = jnp.einsum("qd,kd->qk", qh, kh, preferred_element_type=f32) * scale
        m = jnp.max(s, axis=-1, keepdims=True)
        e = jnp.exp(s - m)
        denom = jnp.sum(e, axis=-1, keepdims=True)
        r = pl.reciprocal(denom, approx=True)     # EUP slot (nearly free)
        r = r * (2.0 - denom * r)                 # one Newton step -> ~f32 exact
        p = e * r
        yh = jnp.dot(p, vh, preferred_element_type=f32)      # (S, d_k)
        # Fused "transpose+reshape+Linear":
        #   concat_h(y_h) @ Wo == sum_h  y_h @ Wo[h*d_k:(h+1)*d_k, :]
        acc = acc + jnp.dot(yh, wo_ref[sl, :].astype(f32),
                            preferred_element_type=f32)

    o_ref[0] = (acc + bo).astype(o_ref.dtype)


# -------------------------------- wrapper ------------------------------------
@functools.partial(jax.jit, static_argnames=("h",))
def multi_head_attention_block(q, k, v, wq_t, wk_t, wv_t, wo_t, b_o, *, h):
    """q, k, v: (B, S, D).  w*_t: (D, D) pre-transposed (x @ W).  b_o: (D,)."""
    B, S, D = q.shape
    assert D % h == 0 and D % 2 == 0
    d_k = D // h

    t_cos, t_sin = _rope_tables(S, D)     # (S, D) constants
    perm = _swap_perm_matrix(D)           # (D, D) constant

    kernel = functools.partial(_mha_kernel, h=h, d_k=d_k)

    flops = int(B * (12 * S * D * D + 4 * S * S * D))
    transcendentals = int(B * h * S * (S + 1))          # exp + reciprocal
    bytes_accessed = int(4 * (4 * B * S * D + 5 * D * D + D + 2 * S * D))

    row_spec = pl.BlockSpec((1, S, D), lambda b: (b, 0, 0))
    mat_spec = pl.BlockSpec((D, D), lambda b: (0, 0))     # resident across grid

    out = pl.pallas_call(
        kernel,
        out_shape=jax.ShapeDtypeStruct((B, S, D), q.dtype),
        grid_spec=pltpu.PrefetchScalarGridSpec(
            num_scalar_prefetch=0,
            grid=(B,),
            in_specs=[
                row_spec, row_spec, row_spec,              # q, k, v
                mat_spec, mat_spec, mat_spec, mat_spec,    # Wq^T, Wk^T, Wv^T, Wo^T
                pl.BlockSpec((1, D), lambda b: (0, 0)),    # bias
                mat_spec,                                  # swap permutation
                pl.BlockSpec((S, D), lambda b: (0, 0)),    # cos table
                pl.BlockSpec((S, D), lambda b: (0, 0)),    # sin table
            ],
            out_specs=pl.BlockSpec((1, S, D), lambda b: (b, 0, 0)),
        ),
        compiler_params=pltpu.CompilerParams(
            dimension_semantics=("parallel",),
        ),
        cost_estimate=pl.CostEstimate(
            flops=flops,
            transcendentals=transcendentals,
            bytes_accessed=bytes_accessed,
        ),
    )(q, k, v, wq_t, wk_t, wv_t, wo_t, b_o.reshape(1, D), perm, t_cos, t_sin)
    return out


# ------------------------------ JAX reference --------------------------------
def _swap_adjacent_ref(x):
    d = x.shape[-1]
    xr = x.reshape(x.shape[:-1] + (d // 2, 2))
    return xr[..., ::-1].reshape(x.shape)


def _reference_forward(q, k, v, wq_t, wk_t, wv_t, wo_t, b_o, h):
    B, S, D = q.shape
    d_k = D // h
    t_cos, t_sin = _rope_tables(S, D)
    qp = q @ wq_t
    kp = k @ wk_t
    vp = v @ wv_t
    qp = qp * t_cos + _swap_adjacent_ref(qp) * t_sin
    kp = kp * t_cos + _swap_adjacent_ref(kp) * t_sin

    def split(x):
        return x.reshape(B, S, h, d_k).transpose(0, 2, 1, 3)   # (B, h, S, d_k)

    qh, kh, vh = split(qp), split(kp), split(vp)
    scores = jnp.einsum("bhqd,bhkd->bhqk", qh, kh) / math.sqrt(d_k)
    p = jax.nn.softmax(scores, axis=-1)
    y = jnp.einsum("bhqk,bhkd->bhqd", p, vh)
    y = y.transpose(0, 2, 1, 3).reshape(B, S, D)
    return y @ wo_t + b_o


# ----------------------------------- main ------------------------------------
if __name__ == "__main__":
    batch, n_seq, d_model, n_heads = 2, 8, 32, 4

    key = jax.random.PRNGKey(0)
    kq, kk, kv, k1, k2, k3, k4, k5 = jax.random.split(key, 8)

    q = jax.random.normal(kq, (batch, n_seq, d_model), dtype=jnp.float32)
    k = jax.random.normal(kk, (batch, n_seq, d_model), dtype=jnp.float32)
    v = jax.random.normal(kv, (batch, n_seq, d_model), dtype=jnp.float32)

    # nn.Linear-style init; weights stored pre-transposed (D_in, D_out) so the
    # kernel computes x @ W directly (PyTorch stores (out, in) and does x @ W^T).
    bound = 1.0 / math.sqrt(d_model)
    wq_t = jax.random.uniform(k1, (d_model, d_model), minval=-bound, maxval=bound, dtype=jnp.float32)
    wk_t = jax.random.uniform(k2, (d_model, d_model), minval=-bound, maxval=bound, dtype=jnp.float32)
    wv_t = jax.random.uniform(k3, (d_model, d_model), minval=-bound, maxval=bound, dtype=jnp.float32)
    wo_t = jax.random.uniform(k4, (d_model, d_model), minval=-bound, maxval=bound, dtype=jnp.float32)
    b_o = jax.random.uniform(k5, (d_model,), minval=-bound, maxval=bound, dtype=jnp.float32)

    out = multi_head_attention_block(q, k, v, wq_t, wk_t, wv_t, wo_t, b_o, h=n_heads)
    out = jax.block_until_ready(out)

    ref = _reference_forward(q, k, v, wq_t, wk_t, wv_t, wo_t, b_o, n_heads)
    assert out.shape == (batch, n_seq, d_model)
    max_err = float(jnp.max(jnp.abs(out - ref)))
    assert jnp.allclose(out, ref, atol=1e-3, rtol=1e-3), max_err

    print("KERNEL_OK")
</pallas_src>

<mosaic_0001>
module attributes {stable_mosaic.version = 11 : i64} {
  func.func @_mha_kernel(%arg0: i32, %arg1: memref<1x8x32xf32, #tpu.memory_space<vmem>>, %arg2: memref<1x8x32xf32, #tpu.memory_space<vmem>>, %arg3: memref<1x8x32xf32, #tpu.memory_space<vmem>>, %arg4: memref<32x32xf32, #tpu.memory_space<vmem>>, %arg5: memref<32x32xf32, #tpu.memory_space<vmem>>, %arg6: memref<32x32xf32, #tpu.memory_space<vmem>>, %arg7: memref<32x32xf32, #tpu.memory_space<vmem>>, %arg8: memref<1x32xf32, #tpu.memory_space<vmem>>, %arg9: memref<32x32xf32, #tpu.memory_space<vmem>>, %arg10: memref<8x32xf32, #tpu.memory_space<vmem>>, %arg11: memref<8x32xf32, #tpu.memory_space<vmem>>, %arg12: memref<1x8x32xf32, #tpu.memory_space<vmem>>) attributes {dimension_semantics = [#tpu.dimension_semantics<parallel>], iteration_bounds = array<i64: 2>, scalar_prefetch = 0 : i64, scratch_operands = 0 : i64, tpu.core_type = #tpu.core_type<tc>, window_params = [{transform_indices = @transform_0, window_bounds = array<i64: 1, 8, 32>}, {transform_indices = @transform_1, window_bounds = array<i64: 1, 8, 32>}, {transform_indices = @transform_2, window_bounds = array<i64: 1, 8, 32>}, {pipeline_mode = #tpu.pipeline_mode<synchronous>, transform_indices = @transform_3, window_bounds = array<i64: 32, 32>}, {pipeline_mode = #tpu.pipeline_mode<synchronous>, transform_indices = @transform_4, window_bounds = array<i64: 32, 32>}, {pipeline_mode = #tpu.pipeline_mode<synchronous>, transform_indices = @transform_5, window_bounds = array<i64: 32, 32>}, {pipeline_mode = #tpu.pipeline_mode<synchronous>, transform_indices = @transform_6, window_bounds = array<i64: 32, 32>}, {pipeline_mode = #tpu.pipeline_mode<synchronous>, transform_indices = @transform_7, window_bounds = array<i64: 1, 32>}, {pipeline_mode = #tpu.pipeline_mode<synchronous>, transform_indices = @transform_8, window_bounds = array<i64: 32, 32>}, {pipeline_mode = #tpu.pipeline_mode<synchronous>, transform_indices = @transform_9, window_bounds = array<i64: 8, 32>}, {pipeline_mode = #tpu.pipeline_mode<synchronous>, transform_indices = @transform_10, window_bounds = array<i64: 8, 32>}, {transform_indices = @transform_11, window_bounds = array<i64: 1, 8, 32>}]} {
    %c0 = arith.constant 0 : index
    %c0_0 = arith.constant 0 : index
    %c0_1 = arith.constant 0 : index
    %0 = vector.load %arg1[%c0, %c0_0, %c0_1] : memref<1x8x32xf32, #tpu.memory_space<vmem>>, vector<1x8x32xf32>
    %1 = vector.shape_cast %0 : vector<1x8x32xf32> to vector<8x32xf32>
    %c0_2 = arith.constant 0 : index
    %c0_3 = arith.constant 0 : index
    %c0_4 = arith.constant 0 : index
    %2 = vector.load %arg2[%c0_2, %c0_3, %c0_4] : memref<1x8x32xf32, #tpu.memory_space<vmem>>, vector<1x8x32xf32>
    %3 = vector.shape_cast %2 : vector<1x8x32xf32> to vector<8x32xf32>
    %c0_5 = arith.constant 0 : index
    %c0_6 = arith.constant 0 : index
    %c0_7 = arith.constant 0 : index
    %4 = vector.load %arg3[%c0_5, %c0_6, %c0_7] : memref<1x8x32xf32, #tpu.memory_space<vmem>>, vector<1x8x32xf32>
    %5 = vector.shape_cast %4 : vector<1x8x32xf32> to vector<8x32xf32>
    %c0_8 = arith.constant 0 : index
    %c0_9 = arith.constant 0 : index
    %6 = vector.load %arg4[%c0_8, %c0_9] : memref<32x32xf32, #tpu.memory_space<vmem>>, vector<32x32xf32>
    %cst = arith.constant dense<0.000000e+00> : vector<8x32xf32>
    %7 = tpu.matmul %1, %6, %cst {dimension_numbers = #tpu.dot_dimension_numbers<[1], [0], [0], [1], [0, 0, 1, 1], [], []>} : vector<8x32xf32>, vector<32x32xf32>, vector<8x32xf32> -> vector<8x32xf32>
    %c0_10 = arith.constant 0 : index
    %c0_11 = arith.constant 0 : index
    %8 = vector.load %arg5[%c0_10, %c0_11] : memref<32x32xf32, #tpu.memory_space<vmem>>, vector<32x32xf32>
    %cst_12 = arith.constant dense<0.000000e+00> : vector<8x32xf32>
    %9 = tpu.matmul %3, %8, %cst_12 {dimension_numbers = #tpu.dot_dimension_numbers<[1], [0], [0], [1], [0, 0, 1, 1], [], []>} : vector<8x32xf32>, vector<32x32xf32>, vector<8x32xf32> -> vector<8x32xf32>
    %c0_13 = arith.constant 0 : index
    %c0_14 = arith.constant 0 : index
    %10 = vector.load %arg6[%c0_13, %c0_14] : memref<32x32xf32, #tpu.memory_space<vmem>>, vector<32x32xf32>
    %cst_15 = arith.constant dense<0.000000e+00> : vector<8x32xf32>
    %11 = tpu.matmul %5, %10, %cst_15 {dimension_numbers = #tpu.dot_dimension_numbers<[1], [0], [0], [1], [0, 0, 1, 1], [], []>} : vector<8x32xf32>, vector<32x32xf32>, vector<8x32xf32> -> vector<8x32xf32>
    %c0_16 = arith.constant 0 : index
    %c0_17 = arith.constant 0 : index
    %12 = vector.load %arg10[%c0_16, %c0_17] : memref<8x32xf32, #tpu.memory_space<vmem>>, vector<8x32xf32>
    %c0_18 = arith.constant 0 : index
    %c0_19 = arith.constant 0 : index
    %13 = vector.load %arg11[%c0_18, %c0_19] : memref<8x32xf32, #tpu.memory_space<vmem>>, vector<8x32xf32>
    %c0_20 = arith.constant 0 : index
    %c0_21 = arith.constant 0 : index
    %14 = vector.load %arg9[%c0_20, %c0_21] : memref<32x32xf32, #tpu.memory_space<vmem>>, vector<32x32xf32>
    %15 = arith.mulf %7, %12 : vector<8x32xf32>
    %cst_22 = arith.constant dense<0.000000e+00> : vector<8x32xf32>
    %16 = tpu.matmul %7, %14, %cst_22 {dimension_numbers = #tpu.dot_dimension_numbers<[1], [0], [0], [1], [0, 0, 1, 1], [], []>} : vector<8x32xf32>, vector<32x32xf32>, vector<8x32xf32> -> vector<8x32xf32>
    %17 = arith.mulf %16, %13 : vector<8x32xf32>
    %18 = arith.addf %15, %17 : vector<8x32xf32>
    %19 = arith.mulf %9, %12 : vector<8x32xf32>
    %cst_23 = arith.constant dense<0.000000e+00> : vector<8x32xf32>
    %20 = tpu.matmul %9, %14, %cst_23 {dimension_numbers = #tpu.dot_dimension_numbers<[1], [0], [0], [1], [0, 0, 1, 1], [], []>} : vector<8x32xf32>, vector<32x32xf32>, vector<8x32xf32> -> vector<8x32xf32>
    %21 = arith.mulf %20, %13 : vector<8x32xf32>
    %22 = arith.addf %19, %21 : vector<8x32xf32>
    %c0_24 = arith.constant 0 : index
    %c0_25 = arith.constant 0 : index
    %23 = vector.load %arg8[%c0_24, %c0_25] : memref<1x32xf32, #tpu.memory_space<vmem>>, vector<1x32xf32>
    %cst_26 = arith.constant 0.000000e+00 : f32
    %24 = vector.broadcast %cst_26 : f32 to vector<8x32xf32>
    %25 = vector.extract_strided_slice %18 {offsets = [0, 0], sizes = [8, 8], strides = [1, 1]} : vector<8x32xf32> to vector<8x8xf32>
    %26 = vector.extract_strided_slice %22 {offsets = [0, 0], sizes = [8, 8], strides = [1, 1]} : vector<8x32xf32> to vector<8x8xf32>
    %27 = vector.extract_strided_slice %11 {offsets = [0, 0], sizes = [8, 8], strides = [1, 1]} : vector<8x32xf32> to vector<8x8xf32>
    "tpu.trace_start"() <{level = 10 : i32, message = "qd,kd->qk"}> : () -> ()
    %cst_27 = arith.constant dense<0.000000e+00> : vector<8x8xf32>
    %28 = tpu.matmul %25, %26, %cst_27 {dimension_numbers = #tpu.dot_dimension_numbers<[1], [1], [0], [0], [0, 0, 1, 0], [], []>} : vector<8x8xf32>, vector<8x8xf32>, vector<8x8xf32> -> vector<8x8xf32>
    "tpu.trace_stop"() : () -> ()
    %cst_28 = arith.constant 0.353553385 : f32
    %29 = vector.broadcast %cst_28 : f32 to vector<8x8xf32>
    %30 = arith.mulf %28, %29 : vector<8x8xf32>
    %cst_29 = arith.constant dense<0xFF800000> : vector<8xf32>
    %31 = vector.multi_reduction <maximumf>, %30, %cst_29 [1] : vector<8x8xf32> to vector<8xf32>
    %32 = vector.shape_cast %31 : vector<8xf32> to vector<8x1xf32>
    %33 = vector.broadcast %32 : vector<8x1xf32> to vector<8x8xf32>
    %34 = arith.subf %30, %33 : vector<8x8xf32>
    %35 = math.exp %34 : vector<8x8xf32>
    %cst_30 = arith.constant dense<0.000000e+00> : vector<8xf32>
    %36 = vector.multi_reduction <add>, %35, %cst_30 [1] : vector<8x8xf32> to vector<8xf32>
    %37 = vector.shape_cast %36 : vector<8xf32> to vector<8x1xf32>
    %38 = tpu.reciprocal %37 {approx = true} : vector<8x1xf32> -> vector<8x1xf32>
    %39 = arith.mulf %37, %38 : vector<8x1xf32>
    %cst_31 = arith.constant 2.000000e+00 : f32
    %40 = vector.broadcast %cst_31 : f32 to vector<8x1xf32>
    %41 = arith.subf %40, %39 : vector<8x1xf32>
    %42 = arith.mulf %38, %41 : vector<8x1xf32>
    %43 = vector.broadcast %42 : vector<8x1xf32> to vector<8x8xf32>
    %44 = arith.mulf %35, %43 : vector<8x8xf32>
    %cst_32 = arith.constant dense<0.000000e+00> : vector<8x8xf32>
    %45 = tpu.matmul %44, %27, %cst_32 {dimension_numbers = #tpu.dot_dimension_numbers<[1], [0], [0], [1], [0, 0, 1, 1], [], []>} : vector<8x8xf32>, vector<8x8xf32>, vector<8x8xf32> -> vector<8x8xf32>
    %c0_33 = arith.constant 0 : index
    %c0_34 = arith.constant 0 : index
    %46 = vector.load %arg7[%c0_33, %c0_34] : memref<32x32xf32, #tpu.memory_space<vmem>>, vector<8x32xf32>
    %cst_35 = arith.constant dense<0.000000e+00> : vector<8x32xf32>
    %47 = tpu.matmul %45, %46, %cst_35 {dimension_numbers = #tpu.dot_dimension_numbers<[1], [0], [0], [1], [0, 0, 1, 1], [], []>} : vector<8x8xf32>, vector<8x32xf32>, vector<8x32xf32> -> vector<8x32xf32>
    %48 = arith.addf %24, %47 : vector<8x32xf32>
    %49 = vector.extract_strided_slice %18 {offsets = [0, 8], sizes = [8, 8], strides = [1, 1]} : vector<8x32xf32> to vector<8x8xf32>
    %50 = vector.extract_strided_slice %22 {offsets = [0, 8], sizes = [8, 8], strides = [1, 1]} : vector<8x32xf32> to vector<8x8xf32>
    %51 = vector.extract_strided_slice %11 {offsets = [0, 8], sizes = [8, 8], strides = [1, 1]} : vector<8x32xf32> to vector<8x8xf32>
    "tpu.trace_start"() <{level = 10 : i32, message = "qd,kd->qk"}> : () -> ()
    %cst_36 = arith.constant dense<0.000000e+00> : vector<8x8xf32>
    %52 = tpu.matmul %49, %50, %cst_36 {dimension_numbers = #tpu.dot_dimension_numbers<[1], [1], [0], [0], [0, 0, 1, 0], [], []>} : vector<8x8xf32>, vector<8x8xf32>, vector<8x8xf32> -> vector<8x8xf32>
    "tpu.trace_stop"() : () -> ()
    %cst_37 = arith.constant 0.353553385 : f32
    %53 = vector.broadcast %cst_37 : f32 to vector<8x8xf32>
    %54 = arith.mulf %52, %53 : vector<8x8xf32>
    %cst_38 = arith.constant dense<0xFF800000> : vector<8xf32>
    %55 = vector.multi_reduction <maximumf>, %54, %cst_38 [1] : vector<8x8xf32> to vector<8xf32>
    %56 = vector.shape_cast %55 : vector<8xf32> to vector<8x1xf32>
    %57 = vector.broadcast %56 : vector<8x1xf32> to vector<8x8xf32>
    %58 = arith.subf %54, %57 : vector<8x8xf32>
    %59 = math.exp %58 : vector<8x8xf32>
    %cst_39 = arith.constant dense<0.000000e+00> : vector<8xf32>
    %60 = vector.multi_reduction <add>, %59, %cst_39 [1] : vector<8x8xf32> to vector<8xf32>
    %61 = vector.shape_cast %60 : vector<8xf32> to vector<8x1xf32>
    %62 = tpu.reciprocal %61 {approx = true} : vector<8x1xf32> -> vector<8x1xf32>
    %63 = arith.mulf %61, %62 : vector<8x1xf32>
    %cst_40 = arith.constant 2.000000e+00 : f32
    %64 = vector.broadcast %cst_40 : f32 to vector<8x1xf32>
    %65 = arith.subf %64, %63 : vector<8x1xf32>
    %66 = arith.mulf %62, %65 : vector<8x1xf32>
    %67 = vector.broadcast %66 : vector<8x1xf32> to vector<8x8xf32>
    %68 = arith.mulf %59, %67 : vector<8x8xf32>
    %cst_41 = arith.constant dense<0.000000e+00> : vector<8x8xf32>
    %69 = tpu.matmul %68, %51, %cst_41 {dimension_numbers = #tpu.dot_dimension_numbers<[1], [0], [0], [1], [0, 0, 1, 1], [], []>} : vector<8x8xf32>, vector<8x8xf32>, vector<8x8xf32> -> vector<8x8xf32>
    %c8 = arith.constant 8 : index
    %c0_42 = arith.constant 0 : index
    %70 = vector.load %arg7[%c8, %c0_42] : memref<32x32xf32, #tpu.memory_space<vmem>>, vector<8x32xf32>
    %cst_43 = arith.constant dense<0.000000e+00> : vector<8x32xf32>
    %71 = tpu.matmul %69, %70, %cst_43 {dimension_numbers = #tpu.dot_dimension_numbers<[1], [0], [0], [1], [0, 0, 1, 1], [], []>} : vector<8x8xf32>, vector<8x32xf32>, vector<8x32xf32> -> vector<8x32xf32>
    %72 = arith.addf %48, %71 : vector<8x32xf32>
    %73 = vector.extract_strided_slice %18 {offsets = [0, 16], sizes = [8, 8], strides = [1, 1]} : vector<8x32xf32> to vector<8x8xf32>
    %74 = vector.extract_strided_slice %22 {offsets = [0, 16], sizes = [8, 8], strides = [1, 1]} : vector<8x32xf32> to vector<8x8xf32>
    %75 = vector.extract_strided_slice %11 {offsets = [0, 16], sizes = [8, 8], strides = [1, 1]} : vector<8x32xf32> to vector<8x8xf32>
    "tpu.trace_start"() <{level = 10 : i32, message = "qd,kd->qk"}> : () -> ()
    %cst_44 = arith.constant dense<0.000000e+00> : vector<8x8xf32>
    %76 = tpu.matmul %73, %74, %cst_44 {dimension_numbers = #tpu.dot_dimension_numbers<[1], [1], [0], [0], [0, 0, 1, 0], [], []>} : vector<8x8xf32>, vector<8x8xf32>, vector<8x8xf32> -> vector<8x8xf32>
    "tpu.trace_stop"() : () -> ()
    %cst_45 = arith.constant 0.353553385 : f32
    %77 = vector.broadcast %cst_45 : f32 to vector<8x8xf32>
    %78 = arith.mulf %76, %77 : vector<8x8xf32>
    %cst_46 = arith.constant dense<0xFF800000> : vector<8xf32>
    %79 = vector.multi_reduction <maximumf>, %78, %cst_46 [1] : vector<8x8xf32> to vector<8xf32>
    %80 = vector.shape_cast %79 : vector<8xf32> to vector<8x1xf32>
    %81 = vector.broadcast %80 : vector<8x1xf32> to vector<8x8xf32>
    %82 = arith.subf %78, %81 : vector<8x8xf32>
    %83 = math.exp %82 : vector<8x8xf32>
    %cst_47 = arith.constant dense<0.000000e+00> : vector<8xf32>
    %84 = vector.multi_reduction <add>, %83, %cst_47 [1] : vector<8x8xf32> to vector<8xf32>
    %85 = vector.shape_cast %84 : vector<8xf32> to vector<8x1xf32>
    %86 = tpu.reciprocal %85 {approx = true} : vector<8x1xf32> -> vector<8x1xf32>
    %87 = arith.mulf %85, %86 : vector<8x1xf32>
    %cst_48 = arith.constant 2.000000e+00 : f32
    %88 = vector.broadcast %cst_48 : f32 to vector<8x1xf32>
    %89 = arith.subf %88, %87 : vector<8x1xf32>
    %90 = arith.mulf %86, %89 : vector<8x1xf32>
    %91 = vector.broadcast %90 : vector<8x1xf32> to vector<8x8xf32>
    %92 = arith.mulf %83, %91 : vector<8x8xf32>
    %cst_49 = arith.constant dense<0.000000e+00> : vector<8x8xf32>
    %93 = tpu.matmul %92, %75, %cst_49 {dimension_numbers = #tpu.dot_dimension_numbers<[1], [0], [0], [1], [0, 0, 1, 1], [], []>} : vector<8x8xf32>, vector<8x8xf32>, vector<8x8xf32> -> vector<8x8xf32>
    %c16 = arith.constant 16 : index
    %c0_50 = arith.constant 0 : index
    %94 = vector.load %arg7[%c16, %c0_50] : memref<32x32xf32, #tpu.memory_space<vmem>>, vector<8x32xf32>
    %cst_51 = arith.constant dense<0.000000e+00> : vector<8x32xf32>
    %95 = tpu.matmul %93, %94, %cst_51 {dimension_numbers = #tpu.dot_dimension_numbers<[1], [0], [0], [1], [0, 0, 1, 1], [], []>} : vector<8x8xf32>, vector<8x32xf32>, vector<8x32xf32> -> vector<8x32xf32>
    %96 = arith.addf %72, %95 : vector<8x32xf32>
    %97 = vector.extract_strided_slice %18 {offsets = [0, 24], sizes = [8, 8], strides = [1, 1]} : vector<8x32xf32> to vector<8x8xf32>
    %98 = vector.extract_strided_slice %22 {offsets = [0, 24], sizes = [8, 8], strides = [1, 1]} : vector<8x32xf32> to vector<8x8xf32>
    %99 = vector.extract_strided_slice %11 {offsets = [0, 24], sizes = [8, 8], strides = [1, 1]} : vector<8x32xf32> to vector<8x8xf32>
    "tpu.trace_start"() <{level = 10 : i32, message = "qd,kd->qk"}> : () -> ()
    %cst_52 = arith.constant dense<0.000000e+00> : vector<8x8xf32>
    %100 = tpu.matmul %97, %98, %cst_52 {dimension_numbers = #tpu.dot_dimension_numbers<[1], [1], [0], [0], [0, 0, 1, 0], [], []>} : vector<8x8xf32>, vector<8x8xf32>, vector<8x8xf32> -> vector<8x8xf32>
    "tpu.trace_stop"() : () -> ()
    %cst_53 = arith.constant 0.353553385 : f32
    %101 = vector.broadcast %cst_53 : f32 to vector<8x8xf32>
    %102 = arith.mulf %100, %101 : vector<8x8xf32>
    %cst_54 = arith.constant dense<0xFF800000> : vector<8xf32>
    %103 = vector.multi_reduction <maximumf>, %102, %cst_54 [1] : vector<8x8xf32> to vector<8xf32>
    %104 = vector.shape_cast %103 : vector<8xf32> to vector<8x1xf32>
    %105 = vector.broadcast %104 : vector<8x1xf32> to vector<8x8xf32>
    %106 = arith.subf %102, %105 : vector<8x8xf32>
    %107 = math.exp %106 : vector<8x8xf32>
    %cst_55 = arith.constant dense<0.000000e+00> : vector<8xf32>
    %108 = vector.multi_reduction <add>, %107, %cst_55 [1] : vector<8x8xf32> to vector<8xf32>
    %109 = vector.shape_cast %108 : vector<8xf32> to vector<8x1xf32>
    %110 = tpu.reciprocal %109 {approx = true} : vector<8x1xf32> -> vector<8x1xf32>
    %111 = arith.mulf %109, %110 : vector<8x1xf32>
    %cst_56 = arith.constant 2.000000e+00 : f32
    %112 = vector.broadcast %cst_56 : f32 to vector<8x1xf32>
    %113 = arith.subf %112, %111 : vector<8x1xf32>
    %114 = arith.mulf %110, %113 : vector<8x1xf32>
    %115 = vector.broadcast %114 : vector<8x1xf32> to vector<8x8xf32>
    %116 = arith.mulf %107, %115 : vector<8x8xf32>
    %cst_57 = arith.constant dense<0.000000e+00> : vector<8x8xf32>
    %117 = tpu.matmul %116, %99, %cst_57 {dimension_numbers = #tpu.dot_dimension_numbers<[1], [0], [0], [1], [0, 0, 1, 1], [], []>} : vector<8x8xf32>, vector<8x8xf32>, vector<8x8xf32> -> vector<8x8xf32>
    %c24 = arith.constant 24 : index
    %c0_58 = arith.constant 0 : index
    %118 = vector.load %arg7[%c24, %c0_58] : memref<32x32xf32, #tpu.memory_space<vmem>>, vector<8x32xf32>
    %cst_59 = arith.constant dense<0.000000e+00> : vector<8x32xf32>
    %119 = tpu.matmul %117, %118, %cst_59 {dimension_numbers = #tpu.dot_dimension_numbers<[1], [0], [0], [1], [0, 0, 1, 1], [], []>} : vector<8x8xf32>, vector<8x32xf32>, vector<8x32xf32> -> vector<8x32xf32>
    %120 = arith.addf %96, %119 : vector<8x32xf32>
    %121 = vector.broadcast %23 : vector<1x32xf32> to vector<8x32xf32>
    %122 = arith.addf %120, %121 : vector<8x32xf32>
    %c0_60 = arith.constant 0 : index
    %c0_61 = arith.constant 0 : index
    %c0_62 = arith.constant 0 : index
    %123 = vector.load %arg12[%c0_60, %c0_61, %c0_62] : memref<1x8x32xf32, #tpu.memory_space<vmem>>, vector<1x8x32xf32>
    %124 = vector.shape_cast %123 : vector<1x8x32xf32> to vector<8x32xf32>
    %125 = vector.shape_cast %122 : vector<8x32xf32> to vector<1x8x32xf32>
    tpu.vector_store %arg12[%c0_60, %c0_61, %c0_62], %125 {strides = array<i32>} : memref<1x8x32xf32, #tpu.memory_space<vmem>>, vector<1x8x32xf32>,
    return
  }
  func.func @transform_0(%arg0: i32) -> (i32, i32, i32) {
    %c0_i32 = arith.constant 0 : i32
    %c0_i32_0 = arith.constant 0 : i32
    %c0_i32_1 = arith.constant 0 : i32
    return %arg0, %c0_i32, %c0_i32_0 : i32, i32, i32
  }
  func.func @transform_1(%arg0: i32) -> (i32, i32, i32) {
    %c0_i32 = arith.constant 0 : i32
    %c0_i32_0 = arith.constant 0 : i32
    %c0_i32_1 = arith.constant 0 : i32
    return %arg0, %c0_i32, %c0_i32_0 : i32, i32, i32
  }
  func.func @transform_2(%arg0: i32) -> (i32, i32, i32) {
    %c0_i32 = arith.constant 0 : i32
    %c0_i32_0 = arith.constant 0 : i32
    %c0_i32_1 = arith.constant 0 : i32
    return %arg0, %c0_i32, %c0_i32_0 : i32, i32, i32
  }
  func.func @transform_3(%arg0: i32) -> (i32, i32) {
    %c0_i32 = arith.constant 0 : i32
    %c0_i32_0 = arith.constant 0 : i32
    %c0_i32_1 = arith.constant 0 : i32
    return %c0_i32, %c0_i32_0 : i32, i32
  }
  func.func @transform_4(%arg0: i32) -> (i32, i32) {
    %c0_i32 = arith.constant 0 : i32
    %c0_i32_0 = arith.constant 0 : i32
    %c0_i32_1 = arith.constant 0 : i32
    return %c0_i32, %c0_i32_0 : i32, i32
  }
  func.func @transform_5(%arg0: i32) -> (i32, i32) {
    %c0_i32 = arith.constant 0 : i32
    %c0_i32_0 = arith.constant 0 : i32
    %c0_i32_1 = arith.constant 0 : i32
    return %c0_i32, %c0_i32_0 : i32, i32
  }
  func.func @transform_6(%arg0: i32) -> (i32, i32) {
    %c0_i32 = arith.constant 0 : i32
    %c0_i32_0 = arith.constant 0 : i32
    %c0_i32_1 = arith.constant 0 : i32
    return %c0_i32, %c0_i32_0 : i32, i32
  }
  func.func @transform_7(%arg0: i32) -> (i32, i32) {
    %c0_i32 = arith.constant 0 : i32
    %c0_i32_0 = arith.constant 0 : i32
    %c0_i32_1 = arith.constant 0 : i32
    return %c0_i32, %c0_i32_0 : i32, i32
  }
  func.func @transform_8(%arg0: i32) -> (i32, i32) {
    %c0_i32 = arith.constant 0 : i32
    %c0_i32_0 = arith.constant 0 : i32
    %c0_i32_1 = arith.constant 0 : i32
    return %c0_i32, %c0_i32_0 : i32, i32
  }
  func.func @transform_9(%arg0: i32) -> (i32, i32) {
    %c0_i32 = arith.constant 0 : i32
    %c0_i32_0 = arith.constant 0 : i32
    %c0_i32_1 = arith.constant 0 : i32
    return %c0_i32, %c0_i32_0 : i32, i32
  }
  func.func @transform_10(%arg0: i32) -> (i32, i32) {
    %c0_i32 = arith.constant 0 : i32
    %c0_i32_0 = arith.constant 0 : i32
    %c0_i32_1 = arith.constant 0 : i32
    return %c0_i32, %c0_i32_0 : i32, i32
  }
  func.func @transform_11(%arg0: i32) -> (i32, i32, i32) {
    %c0_i32 = arith.constant 0 : i32
    %c0_i32_0 = arith.constant 0 : i32
    %c0_i32_1 = arith.constant 0 : i32
    return %arg0, %c0_i32, %c0_i32_0 : i32, i32, i32
  }
}

</mosaic_0001>

<llo_original>
// kernel: multi_head_attention_block.1
$region0: #{multi_head_attention_block.1}
  #allocation0 [shape = 'u32[]', space=smem, size = 0x4, offset = 0x4, fixed_abs, tag = 'smem constant byte address 0x4 - core index']
  #allocation1 [shape = 'u32[144,128]{1,0:T(1,128)}', space=vmem, size = 0x12000, scoped, tag = 'internal scratch']
  %s0 = inlined_call_operand.hbm [shape: f32[2,8,32], index: 0, kind: input, shape index: {}]
  %s1 = inlined_call_operand.hbm [shape: f32[2,8,32], index: 1, kind: input, shape index: {}]
  %s2 = inlined_call_operand.hbm [shape: f32[2,8,32], index: 2, kind: input, shape index: {}]
  %s3 = inlined_call_operand.hbm [shape: f32[32,32], index: 3, kind: input, shape index: {}]
  %s4 = inlined_call_operand.hbm [shape: f32[32,32], index: 4, kind: input, shape index: {}]
  %s5 = inlined_call_operand.hbm [shape: f32[32,32], index: 5, kind: input, shape index: {}]
  %s6 = inlined_call_operand.hbm [shape: f32[32,32], index: 6, kind: input, shape index: {}]
  %s7 = inlined_call_operand.vmem [shape: f32[1,32], index: 7, kind: input, shape index: {}]
  %s8 = inlined_call_operand.vmem [shape: f32[32,32], index: 8, kind: input, shape index: {}]
  %s9 = inlined_call_operand.hbm [shape: f32[8,32], index: 9, kind: input, shape index: {}]
  %s10 = inlined_call_operand.vmem [shape: f32[8,32], index: 10, kind: input, shape index: {}]
  %s11 = inlined_call_operand.hbm [shape: f32[2,8,32], index: 11, kind: output, shape index: {}]
  %s12 = sld [smem:[#allocation0]]
  $region109: #{multi_head_attention_block.1} parent=0
    _
  %s14 = ssub.s32 1, %s12
  %s15 = scalar_select 0, %s14, %s12
  $region1: #{multi_head_attention_block.1} parent=0
    #allocation2 [shape = 'u8[8192]{0}', space=vmem, size = 0x2000, scoped, tag = 'input window, operand 0']
    #allocation3 [shape = 's32[2]{0}', space=sflag, size = 0x8, scoped, tag = 'scoped memory for multi_head_attention_block.1']
    #allocation4 [shape = 's32[2]{0}', space=sflag, size = 0x8, scoped, tag = 'scoped memory for multi_head_attention_block.1']
    #allocation5 [shape = 'u8[8192]{0}', space=vmem, size = 0x2000, scoped, tag = 'input window, operand 1']
    #allocation6 [shape = 's32[2]{0}', space=sflag, size = 0x8, scoped, tag = 'scoped memory for multi_head_attention_block.1']
    #allocation7 [shape = 'u8[8192]{0}', space=vmem, size = 0x2000, scoped, tag = 'input window, operand 2']
    #allocation8 [shape = 'u8[16384]{0}', space=vmem, size = 0x4000, scoped, tag = 'input window, operand 3, single buffered']
    #allocation9 [shape = 's32[1]{0}', space=sflag, size = 0x4, scoped, tag = 'scoped memory for multi_head_attention_block.1']
    #allocation10 [shape = 'u8[16384]{0}', space=vmem, size = 0x4000, scoped, tag = 'input window, operand 4, single buffered']
    #allocation11 [shape = 'u8[16384]{0}', space=vmem, size = 0x4000, scoped, tag = 'input window, operand 5, single buffered']
    #allocation12 [shape = 's32[1]{0}', space=sflag, size = 0x4, scoped, tag = 'scoped memory for multi_head_attention_block.1']
    #allocation13 [shape = 'u8[16384]{0}', space=vmem, size = 0x4000, scoped, tag = 'input window, operand 6, single buffered']
    #allocation14 [shape = 'u8[4096]{0}', space=vmem, size = 0x1000, scoped, tag = 'input window, operand 9, single buffered']
    #allocation15 [shape = 's32[1]{0}', space=sflag, size = 0x4, scoped, tag = 'scoped memory for multi_head_attention_block.1']
    #allocation16 [shape = 'u8[8192]{0}', space=vmem, size = 0x2000, scoped, tag = 'output window, operand 0']
    %16 = vsyncpa [#allocation3], 0
    %s17 = scalar_lea.sflag [#allocation3], 1
    %18 = vsyncpa %s17, 0
    %19 = vsyncpa [#allocation6], 0
    %s20 = scalar_lea.sflag [#allocation6], 1
    %21 = vsyncpa %s20, 0
    %22 = vsyncpa [#allocation9], 0
    %23 = vsyncpa [#allocation12], 0
    %24 = vsyncpa [#allocation15], 0
    %25 = vsyncpa [#allocation4], 0
    %s26 = scalar_lea.sflag [#allocation4], 1
    %27 = vsyncpa %s26, 0
    loop: start=0, step=1, limit=4
    $region2: #{multi_head_attention_block.1} parent=1 // loop_pre_header
      _
    $region3: #{multi_head_attention_block.1} parent=1 // loop_header
      %s29 = sphi 0, %s33
      %p30 = scmp.ge.s32.totalorder %s29, 4
      %s39 = sphi 0, %s41
      %s42 = sphi 0, %s39
      %s43 = sphi 0, %s42
      %s59 = sphi 0, %s43
      %s65 = sphi 0, %s67
      %s68 = sphi 0, %s65
      %s69 = sphi 0, %s68
      %s85 = sphi 0, %s69
      %s91 = sphi 0, %s93
      %s94 = sphi 0, %s91
      %s95 = sphi 0, %s94
      %s111 = sphi 0, %s95
      %s115 = sphi 0, %s115
      %s117 = sphi 0, %s115
      %s118 = sphi 0, %s117
      %s132 = sphi 0, %s118
      %s136 = sphi 0, %s136
      %s138 = sphi 0, %s136
      %s139 = sphi 0, %s138
      %s153 = sphi 0, %s139
      %s157 = sphi 0, %s157
      %s159 = sphi 0, %s157
      %s160 = sphi 0, %s159
      %s174 = sphi 0, %s160
      %s178 = sphi 0, %s178
      %s180 = sphi 0, %s178
      %s181 = sphi 0, %s180
      %s195 = sphi 0, %s181
      %s199 = sphi 0, %s199
      %s201 = sphi 0, %s199
      %s202 = sphi 0, %s201
      %s216 = sphi 0, %s202
      %s220 = sphi 0, %s220
      %s222 = sphi 0, %s220
      %s223 = sphi 0, %s222
      %s237 = sphi 0, %s223
      %s241 = sphi 0, %s241
      %s243 = sphi 0, %s241
      %s244 = sphi 0, %s243
      %s258 = sphi 0, %s244
      %s262 = sphi 0, %s262
      %s264 = sphi 0, %s262
      %s265 = sphi 0, %s264
      %s279 = sphi 0, %s265
      %s285 = sphi 0, %s287
      %s288 = sphi 0, %s285
      %s289 = sphi 0, %s288
      %s305 = sphi 0, %s289
    $region4: #{multi_head_attention_block.1} parent=1 // loop_header_branch
      %32 = sbr.rel (%p30) target = $region8
    $region5: #{multi_head_attention_block.1} parent=1 // loop_body
      %s34 = ssub.s32 %s29, 1
      %s35 = ssub.s32 %s29, 2
      %s36 = sadd.s32 %s29, 1
      %s37 = ssub.s32 %s29, %s36
      %p38 = scmp.eq.s32.totalorder %s37, 0
      %s40 = sadd.s32 %s39, 1
      %s41 = scalar_select %p38, %s39, %s40
      %p44 = pneg %p38
      %p45 = scmp.eq.s32.totalorder %s29, 1
      %p46 = por %p44, %p45
      %p47 = scmp.ne.s32.totalorder %s39, %s42
      %p48 = scmp.eq.s32.totalorder %s29, 0
      %p49 = por %p47, %p48
      %p50 = scmp.ne.s32.totalorder %s39, %s42
      %p51 = scmp.eq.s32.totalorder %s34, 1
      %p52 = por %p50, %p51
      %p53 = scmp.ne.s32.totalorder %s42, %s43
      %p54 = scmp.eq.s32.totalorder %s34, 0
      %p55 = por %p53, %p54
      %p56 = scmp.ne.s32.totalorder %s42, %s43
      %p57 = scmp.eq.s32.totalorder %s35, 1
      %p58 = por %p56, %p57
      %p60 = scmp.ne.s32.totalorder %s43, %s59
      %p61 = scmp.eq.s32.totalorder %s35, 0
      %p62 = por %p60, %p61
      %s63 = ssub.s32 %s29, %s36
      %p64 = scmp.eq.s32.totalorder %s63, 0
      %s66 = sadd.s32 %s65, 1
      %s67 = scalar_select %p64, %s65, %s66
      %p70 = pneg %p64
      %p71 = scmp.eq.s32.totalorder %s29, 1
      %p72 = por %p70, %p71
      %p73 = scmp.ne.s32.totalorder %s65, %s68
      %p74 = scmp.eq.s32.totalorder %s29, 0
      %p75 = por %p73, %p74
      %p76 = scmp.ne.s32.totalorder %s65, %s68
      %p77 = scmp.eq.s32.totalorder %s34, 1
      %p78 = por %p76, %p77
      %p79 = scmp.ne.s32.totalorder %s68, %s69
      %p80 = scmp.eq.s32.totalorder %s34, 0
      %p81 = por %p79, %p80
      %p82 = scmp.ne.s32.totalorder %s68, %s69
      %p83 = scmp.eq.s32.totalorder %s35, 1
      %p84 = por %p82, %p83
      %p86 = scmp.ne.s32.totalorder %s69, %s85
      %p87 = scmp.eq.s32.totalorder %s35, 0
      %p88 = por %p86, %p87
      %s89 = ssub.s32 %s29, %s36
      %p90 = scmp.eq.s32.totalorder %s89, 0
      %s92 = sadd.s32 %s91, 1
      %s93 = scalar_select %p90, %s91, %s92
      %p96 = pneg %p90
      %p97 = scmp.eq.s32.totalorder %s29, 1
      %p98 = por %p96, %p97
      %p99 = scmp.ne.s32.totalorder %s91, %s94
      %p100 = scmp.eq.s32.totalorder %s29, 0
      %p101 = por %p99, %p100
      %p102 = scmp.ne.s32.totalorder %s91, %s94
      %p103 = scmp.eq.s32.totalorder %s34, 1
      %p104 = por %p102, %p103
      %p105 = scmp.ne.s32.totalorder %s94, %s95
      %p106 = scmp.eq.s32.totalorder %s34, 0
      %p107 = por %p105, %p106
      %p108 = scmp.ne.s32.totalorder %s94, %s95
      %p109 = scmp.eq.s32.totalorder %s35, 1
      %p110 = por %p108, %p109
      %p112 = scmp.ne.s32.totalorder %s95, %s111
      %p113 = scmp.eq.s32.totalorder %s35, 0
      %p114 = por %p112, %p113
      %s116 = sadd.s32 %s115, 1
      %p119 = scmp.eq.s32.totalorder %s29, 1
      %p120 = scmp.ne.s32.totalorder %s115, %s117
      %p121 = scmp.eq.s32.totalorder %s29, 0
      %p122 = por %p120, %p121
      %p123 = scmp.ne.s32.totalorder %s115, %s117
      %p124 = scmp.eq.s32.totalorder %s34, 1
      %p125 = por %p123, %p124
      %p126 = scmp.ne.s32.totalorder %s117, %s118
      %p127 = scmp.eq.s32.totalorder %s34, 0
      %p128 = por %p126, %p127
      %p129 = scmp.ne.s32.totalorder %s117, %s118
      %p130 = scmp.eq.s32.totalorder %s35, 1
      %p131 = por %p129, %p130
      %p133 = scmp.ne.s32.totalorder %s118, %s132
      %p134 = scmp.eq.s32.totalorder %s35, 0
      %p135 = por %p133, %p134
      %s137 = sadd.s32 %s136, 1
      %p140 = scmp.eq.s32.totalorder %s29, 1
      %p141 = scmp.ne.s32.totalorder %s136, %s138
      %p142 = scmp.eq.s32.totalorder %s29, 0
      %p143 = por %p141, %p142
      %p144 = scmp.ne.s32.totalorder %s136, %s138
      %p145 = scmp.eq.s32.totalorder %s34, 1
      %p146 = por %p144, %p145
      %p147 = scmp.ne.s32.totalorder %s138, %s139
      %p148 = scmp.eq.s32.totalorder %s34, 0
      %p149 = por %p147, %p148
      %p150 = scmp.ne.s32.totalorder %s138, %s139
      %p151 = scmp.eq.s32.totalorder %s35, 1
      %p152 = por %p150, %p151
      %p154 = scmp.ne.s32.totalorder %s139, %s153
      %p155 = scmp.eq.s32.totalorder %s35, 0
      %p156 = por %p154, %p155
      %s158 = sadd.s32 %s157, 1
      %p161 = scmp.eq.s32.totalorder %s29, 1
      %p162 = scmp.ne.s32.totalorder %s157, %s159
      %p163 = scmp.eq.s32.totalorder %s29, 0
      %p164 = por %p162, %p163
      %p165 = scmp.ne.s32.totalorder %s157, %s159
      %p166 = scmp.eq.s32.totalorder %s34, 1
      %p167 = por %p165, %p166
      %p168 = scmp.ne.s32.totalorder %s159, %s160
      %p169 = scmp.eq.s32.totalorder %s34, 0
      %p170 = por %p168, %p169
      %p171 = scmp.ne.s32.totalorder %s159, %s160
      %p172 = scmp.eq.s32.totalorder %s35, 1
      %p173 = por %p171, %p172
      %p175 = scmp.ne.s32.totalorder %s160, %s174
      %p176 = scmp.eq.s32.totalorder %s35, 0
      %p177 = por %p175, %p176
      %s179 = sadd.s32 %s178, 1
      %p182 = scmp.eq.s32.totalorder %s29, 1
      %p183 = scmp.ne.s32.totalorder %s178, %s180
      %p184 = scmp.eq.s32.totalorder %s29, 0
      %p185 = por %p183, %p184
      %p186 = scmp.ne.s32.totalorder %s178, %s180
      %p187 = scmp.eq.s32.totalorder %s34, 1
      %p188 = por %p186, %p187
      %p189 = scmp.ne.s32.totalorder %s180, %s181
      %p190 = scmp.eq.s32.totalorder %s34, 0
      %p191 = por %p189, %p190
      %p192 = scmp.ne.s32.totalorder %s180, %s181
      %p193 = scmp.eq.s32.totalorder %s35, 1
      %p194 = por %p192, %p193
      %p196 = scmp.ne.s32.totalorder %s181, %s195
      %p197 = scmp.eq.s32.totalorder %s35, 0
      %p198 = por %p196, %p197
      %s200 = sadd.s32 %s199, 1
      %p203 = scmp.eq.s32.totalorder %s29, 1
      %p204 = scmp.ne.s32.totalorder %s199, %s201
      %p205 = scmp.eq.s32.totalorder %s29, 0
      %p206 = por %p204, %p205
      %p207 = scmp.ne.s32.totalorder %s199, %s201
      %p208 = scmp.eq.s32.totalorder %s34, 1
      %p209 = por %p207, %p208
      %p210 = scmp.ne.s32.totalorder %s201, %s202
      %p211 = scmp.eq.s32.totalorder %s34, 0
      %p212 = por %p210, %p211
      %p213 = scmp.ne.s32.totalorder %s201, %s202
      %p214 = scmp.eq.s32.totalorder %s35, 1
      %p215 = por %p213, %p214
      %p217 = scmp.ne.s32.totalorder %s202, %s216
      %p218 = scmp.eq.s32.totalorder %s35, 0
      %p219 = por %p217, %p218
      %s221 = sadd.s32 %s220, 1
      %p224 = scmp.eq.s32.totalorder %s29, 1
      %p225 = scmp.ne.s32.totalorder %s220, %s222
      %p226 = scmp.eq.s32.totalorder %s29, 0
      %p227 = por %p225, %p226
      %p228 = scmp.ne.s32.totalorder %s220, %s222
      %p229 = scmp.eq.s32.totalorder %s34, 1
      %p230 = por %p228, %p229
      %p231 = scmp.ne.s32.totalorder %s222, %s223
      %p232 = scmp.eq.s32.totalorder %s34, 0
      %p233 = por %p231, %p232
      %p234 = scmp.ne.s32.totalorder %s222, %s223
      %p235 = scmp.eq.s32.totalorder %s35, 1
      %p236 = por %p234, %p235
      %p238 = scmp.ne.s32.totalorder %s223, %s237
      %p239 = scmp.eq.s32.totalorder %s35, 0
      %p240 = por %p238, %p239
      %s242 = sadd.s32 %s241, 1
      %p245 = scmp.eq.s32.totalorder %s29, 1
      %p246 = scmp.ne.s32.totalorder %s241, %s243
      %p247 = scmp.eq.s32.totalorder %s29, 0
      %p248 = por %p246, %p247
      %p249 = scmp.ne.s32.totalorder %s241, %s243
      %p250 = scmp.eq.s32.totalorder %s34, 1
      %p251 = por %p249, %p250
      %p252 = scmp.ne.s32.totalorder %s243, %s244
      %p253 = scmp.eq.s32.totalorder %s34, 0
      %p254 = por %p252, %p253
      %p255 = scmp.ne.s32.totalorder %s243, %s244
      %p256 = scmp.eq.s32.totalorder %s35, 1
      %p257 = por %p255, %p256
      %p259 = scmp.ne.s32.totalorder %s244, %s258
      %p260 = scmp.eq.s32.totalorder %s35, 0
      %p261 = por %p259, %p260
      %s263 = sadd.s32 %s262, 1
      %p266 = scmp.eq.s32.totalorder %s29, 1
      %p267 = scmp.ne.s32.totalorder %s262, %s264
      %p268 = scmp.eq.s32.totalorder %s29, 0
      %p269 = por %p267, %p268
      %p270 = scmp.ne.s32.totalorder %s262, %s264
      %p271 = scmp.eq.s32.totalorder %s34, 1
      %p272 = por %p270, %p271
      %p273 = scmp.ne.s32.totalorder %s264, %s265
      %p274 = scmp.eq.s32.totalorder %s34, 0
      %p275 = por %p273, %p274
      %p276 = scmp.ne.s32.totalorder %s264, %s265
      %p277 = scmp.eq.s32.totalorder %s35, 1
      %p278 = por %p276, %p277
      %p280 = scmp.ne.s32.totalorder %s265, %s279
      %p281 = scmp.eq.s32.totalorder %s35, 0
      %p282 = por %p280, %p281
      %s283 = ssub.s32 %s29, %s36
      %p284 = scmp.eq.s32.totalorder %s283, 0
      %s286 = sadd.s32 %s285, 1
      %s287 = scalar_select %p284, %s285, %s286
      %p290 = pneg %p284
      %p291 = scmp.eq.s32.totalorder %s29, 1
      %p292 = por %p290, %p291
      %p293 = scmp.ne.s32.totalorder %s285, %s288
      %p294 = scmp.eq.s32.totalorder %s29, 0
      %p295 = por %p293, %p294
      %p296 = scmp.ne.s32.totalorder %s285, %s288
      %p297 = scmp.eq.s32.totalorder %s34, 1
      %p298 = por %p296, %p297
      %p299 = scmp.ne.s32.totalorder %s288, %s289
      %p300 = scmp.eq.s32.totalorder %s34, 0
      %p301 = por %p299, %p300
      %p302 = scmp.ne.s32.totalorder %s288, %s289
      %p303 = scmp.eq.s32.totalorder %s35, 1
      %p304 = por %p302, %p303
      %p306 = scmp.ne.s32.totalorder %s289, %s305
      %p307 = scmp.eq.s32.totalorder %s35, 0
      %p308 = por %p306, %p307
      %p309 = scmp.le.s32.totalorder 1, %s29
      %p310 = scmp.lt.s32.totalorder %s29, 3
      %p311 = pnand %p309, %p310
      %p312 = pneg %p311
      // Predicated region
      $region9: #{multi_head_attention_block.1} parent=5 // pred_check
        _
      $region10: #{multi_head_attention_block.1} parent=5 // pred_check_branch
        %314 = sbr.rel (%p311) target = $region12
      $region11: #{multi_head_attention_block.1} parent=5 // pred_region
        %s315 = ssub.s32 %s29, 1
        // Predicated region
        $region13: #{multi_head_attention_block.1} parent=11 // pred_check
          %p316 = pneg %p128
        $region14: #{multi_head_attention_block.1} parent=11 // pred_check_branch
          %318 = sbr.rel (%p316) target = $region16
        $region15: #{multi_head_attention_block.1} parent=11 // pred_region
          %s320 = ssub.s32 512, 512
          %321 = vsyncadd [#allocation9], %s320
          %s322 = sshll.u32 [#allocation8], 4
          %s323 = int_to_ptr.vmem [resolvable:$true] %s322
          %328 = dma.hbm_to_vmem [thread:$0]  %s3, 512, %s323, [#allocation9], 128, 128, 8
        $region16: #{multi_head_attention_block.1} parent=11 // pred_fallthru
          _
        // Predicated region
        $region17: #{multi_head_attention_block.1} parent=11 // pred_check
          %p329 = pneg %p149
        $region18: #{multi_head_attention_block.1} parent=11 // pred_check_branch
          %331 = sbr.rel (%p329) target = $region20
        $region19: #{multi_head_attention_block.1} parent=11 // pred_region
          %s333 = ssub.s32 512, 512
          %334 = vsyncadd [#allocation9], %s333
          %s335 = sshll.u32 [#allocation10], 4
          %s336 = int_to_ptr.vmem [resolvable:$true] %s335
          %341 = dma.hbm_to_vmem [thread:$0]  %s4, 512, %s336, [#allocation9], 128, 128, 8
        $region20: #{multi_head_attention_block.1} parent=11 // pred_fallthru
          _
        // Predicated region
        $region21: #{multi_head_attention_block.1} parent=11 // pred_check
          %p342 = pneg %p170
        $region22: #{multi_head_attention_block.1} parent=11 // pred_check_branch
          %344 = sbr.rel (%p342) target = $region24
        $region23: #{multi_head_attention_block.1} parent=11 // pred_region
          %s346 = ssub.s32 512, 512
          %347 = vsyncadd [#allocation12], %s346
          %s348 = sshll.u32 [#allocation11], 4
          %s349 = int_to_ptr.vmem [resolvable:$true] %s348
          %354 = dma.hbm_to_vmem [thread:$0]  %s5, 512, %s349, [#allocation12], 128, 128, 8
        $region24: #{multi_head_attention_block.1} parent=11 // pred_fallthru
          _
        // Predicated region
        $region25: #{multi_head_attention_block.1} parent=11 // pred_check
          %p355 = pneg %p191
        $region26: #{multi_head_attention_block.1} parent=11 // pred_check_branch
          %357 = sbr.rel (%p355) target = $region28
        $region27: #{multi_head_attention_block.1} parent=11 // pred_region
          %s359 = ssub.s32 512, 512
          %360 = vsyncadd [#allocation12], %s359
          %s361 = sshll.u32 [#allocation13], 4
          %s362 = int_to_ptr.vmem [resolvable:$true] %s361
          %367 = dma.hbm_to_vmem [thread:$0]  %s6, 512, %s362, [#allocation12], 128, 128, 8
        $region28: #{multi_head_attention_block.1} parent=11 // pred_fallthru
          _
        // Predicated region
        $region29: #{multi_head_attention_block.1} parent=11 // pred_check
          %p368 = pneg %p212
        $region30: #{multi_head_attention_block.1} parent=11 // pred_check_branch
          %370 = sbr.rel (%p368) target = $region32
        $region31: #{multi_head_attention_block.1} parent=11 // pred_region
          _
        $region32: #{multi_head_attention_block.1} parent=11 // pred_fallthru
          _
        // Predicated region
        $region33: #{multi_head_attention_block.1} parent=11 // pred_check
          %p371 = pneg %p233
        $region34: #{multi_head_attention_block.1} parent=11 // pred_check_branch
          %373 = sbr.rel (%p371) target = $region36
        $region35: #{multi_head_attention_block.1} parent=11 // pred_region
          _
        $region36: #{multi_head_attention_block.1} parent=11 // pred_fallthru
          _
        // Predicated region
        $region37: #{multi_head_attention_block.1} parent=11 // pred_check
          %p374 = pneg %p254
        $region38: #{multi_head_attention_block.1} parent=11 // pred_check_branch
          %376 = sbr.rel (%p374) target = $region40
        $region39: #{multi_head_attention_block.1} parent=11 // pred_region
          %s378 = ssub.s32 128, 128
          %379 = vsyncadd [#allocation15], %s378
          %s381 = sshll.u32 [#allocation14], 4
          %s382 = int_to_ptr.vmem [resolvable:$true] %s381
          %384 = dma.hbm_to_vmem [thread:$0]  %s9, 128, %s382, [#allocation15]
        $region40: #{multi_head_attention_block.1} parent=11 // pred_fallthru
          _
        // Predicated region
        $region41: #{multi_head_attention_block.1} parent=11 // pred_check
          %p385 = pneg %p275
        $region42: #{multi_head_attention_block.1} parent=11 // pred_check_branch
          %387 = sbr.rel (%p385) target = $region44
        $region43: #{multi_head_attention_block.1} parent=11 // pred_region
          _
        $region44: #{multi_head_attention_block.1} parent=11 // pred_fallthru
          _
      $region12: #{multi_head_attention_block.1} parent=5 // pred_fallthru
        _
      %p388 = scmp.lt.s32.totalorder %s29, 2
      // Predicated region
      $region45: #{multi_head_attention_block.1} parent=5 // pred_check
        %p389 = pneg %p388
      $region46: #{multi_head_attention_block.1} parent=5 // pred_check_branch
        %391 = sbr.rel (%p389) target = $region48
      $region47: #{multi_head_attention_block.1} parent=5 // pred_region
        // Predicated region
        $region49: #{multi_head_attention_block.1} parent=47 // pred_check
          %p392 = pneg %p49
        $region50: #{multi_head_attention_block.1} parent=47 // pred_check_branch
          %394 = sbr.rel (%p392) target = $region52
        $region51: #{multi_head_attention_block.1} parent=47 // pred_region
          %s395 = sand.u32 %s39, 1
          %s396 = scalar_lea.sflag [#allocation3], %s395
          %s397 = sand.u32 %s39, 1
          %s398 = smul.addr %s397, 8
          %s399 = scalar_lea.vmem [#allocation2], %s398
          %s401 = ssub.s32 128, 128
          %402 = vsyncadd %s396, %s401
          %s403 = smul.addr %s29, 128
          %s404 = scalar_lea.hbm %s0, %s403
          %s406 = sshll.u32 %s399, 4
          %s407 = int_to_ptr.vmem [resolvable:$true] %s406
          %409 = dma.hbm_to_vmem [thread:$0]  %s404, 128, %s407, %s396
        $region52: #{multi_head_attention_block.1} parent=47 // pred_fallthru
          _
        // Predicated region
        $region53: #{multi_head_attention_block.1} parent=47 // pred_check
          %p410 = pneg %p75
        $region54: #{multi_head_attention_block.1} parent=47 // pred_check_branch
          %412 = sbr.rel (%p410) target = $region56
        $region55: #{multi_head_attention_block.1} parent=47 // pred_region
          %s413 = sand.u32 %s29, 1
          %s414 = scalar_lea.sflag [#allocation6], %s413
          %s415 = sand.u32 %s65, 1
          %s416 = smul.addr %s415, 8
          %s417 = scalar_lea.vmem [#allocation5], %s416
          %s419 = ssub.s32 128, 128
          %420 = vsyncadd %s414, %s419
          %s421 = smul.addr %s29, 128
          %s422 = scalar_lea.hbm %s1, %s421
          %s424 = sshll.u32 %s417, 4
          %s425 = int_to_ptr.vmem [resolvable:$true] %s424
          %427 = dma.hbm_to_vmem [thread:$0]  %s422, 128, %s425, %s414
        $region56: #{multi_head_attention_block.1} parent=47 // pred_fallthru
          _
        // Predicated region
        $region57: #{multi_head_attention_block.1} parent=47 // pred_check
          %p428 = pneg %p101
        $region58: #{multi_head_attention_block.1} parent=47 // pred_check_branch
          %430 = sbr.rel (%p428) target = $region60
        $region59: #{multi_head_attention_block.1} parent=47 // pred_region
          %s431 = sand.u32 %s29, 1
          %s432 = scalar_lea.sflag [#allocation6], %s431
          %s433 = sand.u32 %s91, 1
          %s434 = smul.addr %s433, 8
          %s435 = scalar_lea.vmem [#allocation7], %s434
          %s437 = ssub.s32 128, 128
          %438 = vsyncadd %s432, %s437
          %s439 = smul.addr %s29, 128
          %s440 = scalar_lea.hbm %s2, %s439
          %s442 = sshll.u32 %s435, 4
          %s443 = int_to_ptr.vmem [resolvable:$true] %s442
          %445 = dma.hbm_to_vmem [thread:$0]  %s440, 128, %s443, %s432
        $region60: #{multi_head_attention_block.1} parent=47 // pred_fallthru
          _
      $region48: #{multi_head_attention_block.1} parent=5 // pred_fallthru
        _
      %p446 = scmp.le.s32.totalorder 1, %s29
      %p447 = scmp.lt.s32.totalorder %s29, 3
      %p448 = pnand %p446, %p447
      %p449 = pneg %p448
      // Predicated region
      $region61: #{multi_head_attention_block.1} parent=5 // pred_check
        _
      $region62: #{multi_head_attention_block.1} parent=5 // pred_check_branch
        %451 = sbr.rel (%p448) target = $region64
      $region63: #{multi_head_attention_block.1} parent=5 // pred_region
        %s452 = ssub.s32 %s29, 1
        %s453 = sand.u32 %s42, 1
        %s454 = scalar_lea.sflag [#allocation3], %s453
        %s455 = sand.u32 %s42, 1
        %s456 = smul.addr %s455, 8
        %s457 = scalar_lea.vmem [#allocation2], %s456
        // Predicated region
        $region65: #{multi_head_attention_block.1} parent=63 // pred_check
          %p458 = pneg %p55
        $region66: #{multi_head_attention_block.1} parent=63 // pred_check_branch
          %460 = sbr.rel (%p458) target = $region68
        $region67: #{multi_head_attention_block.1} parent=63 // pred_region
          %461 = dma.done %s454, 128
        $region68: #{multi_head_attention_block.1} parent=63 // pred_fallthru
          _
        %s462 = sand.u32 %s34, 1
        %s463 = scalar_lea.sflag [#allocation6], %s462
        %s464 = sand.u32 %s68, 1
        %s465 = smul.addr %s464, 8
        %s466 = scalar_lea.vmem [#allocation5], %s465
        // Predicated region
        $region69: #{multi_head_attention_block.1} parent=63 // pred_check
          %p467 = pneg %p81
        $region70: #{multi_head_attention_block.1} parent=63 // pred_check_branch
          %469 = sbr.rel (%p467) target = $region72
        $region71: #{multi_head_attention_block.1} parent=63 // pred_region
          %470 = dma.done %s463, 128
        $region72: #{multi_head_attention_block.1} parent=63 // pred_fallthru
          _
        %s471 = sand.u32 %s34, 1
        %s472 = scalar_lea.sflag [#allocation6], %s471
        %s473 = sand.u32 %s94, 1
        %s474 = smul.addr %s473, 8
        %s475 = scalar_lea.vmem [#allocation7], %s474
        // Predicated region
        $region73: #{multi_head_attention_block.1} parent=63 // pred_check
          %p476 = pneg %p107
        $region74: #{multi_head_attention_block.1} parent=63 // pred_check_branch
          %478 = sbr.rel (%p476) target = $region76
        $region75: #{multi_head_attention_block.1} parent=63 // pred_region
          %479 = dma.done %s472, 128
        $region76: #{multi_head_attention_block.1} parent=63 // pred_fallthru
          _
        // Predicated region
        $region77: #{multi_head_attention_block.1} parent=63 // pred_check
          %p480 = pneg %p128
        $region78: #{multi_head_attention_block.1} parent=63 // pred_check_branch
          %482 = sbr.rel (%p480) target = $region80
        $region79: #{multi_head_attention_block.1} parent=63 // pred_region
          %483 = dma.done [#allocation9], 512
        $region80: #{multi_head_attention_block.1} parent=63 // pred_fallthru
          _
        // Predicated region
        $region81: #{multi_head_attention_block.1} parent=63 // pred_check
          %p484 = pneg %p149
        $region82: #{multi_head_attention_block.1} parent=63 // pred_check_branch
          %486 = sbr.rel (%p484) target = $region84
        $region83: #{multi_head_attention_block.1} parent=63 // pred_region
          %487 = dma.done [#allocation9], 512
        $region84: #{multi_head_attention_block.1} parent=63 // pred_fallthru
          _
        // Predicated region
        $region85: #{multi_head_attention_block.1} parent=63 // pred_check
          %p488 = pneg %p170
        $region86: #{multi_head_attention_block.1} parent=63 // pred_check_branch
          %490 = sbr.rel (%p488) target = $region88
        $region87: #{multi_head_attention_block.1} parent=63 // pred_region
          %491 = dma.done [#allocation12], 512
        $region88: #{multi_head_attention_block.1} parent=63 // pred_fallthru
          _
        // Predicated region
        $region89: #{multi_head_attention_block.1} parent=63 // pred_check
          %p492 = pneg %p191
        $region90: #{multi_head_attention_block.1} parent=63 // pred_check_branch
          %494 = sbr.rel (%p492) target = $region92
        $region91: #{multi_head_attention_block.1} parent=63 // pred_region
          %495 = dma.done [#allocation12], 512
        $region92: #{multi_head_attention_block.1} parent=63 // pred_fallthru
          _
        // Predicated region
        $region93: #{multi_head_attention_block.1} parent=63 // pred_check
          %p496 = pneg %p254
        $region94: #{multi_head_attention_block.1} parent=63 // pred_check_branch
          %498 = sbr.rel (%p496) target = $region96
        $region95: #{multi_head_attention_block.1} parent=63 // pred_region
          %499 = dma.done [#allocation15], 128
        $region96: #{multi_head_attention_block.1} parent=63 // pred_fallthru
          _
        %s500 = sand.u32 %s42, 1
        %s501 = scalar_lea.sflag [#allocation3], %s500
        %s502 = sand.u32 %s42, 1
        %s503 = smul.addr %s502, 8
        %s504 = scalar_lea.vmem [#allocation2], %s503
        %p505 = pneg %p55
        %p506 = pneg %p52
        %s507 = sand.u32 %s34, 1
        %s508 = scalar_lea.sflag [#allocation6], %s507
        %s509 = sand.u32 %s68, 1
        %s510 = smul.addr %s509, 8
        %s511 = scalar_lea.vmem [#allocation5], %s510
        %p512 = pneg %p81
        %p513 = pneg %p78
        %s514 = sand.u32 %s34, 1
        %s515 = scalar_lea.sflag [#allocation6], %s514
        %s516 = sand.u32 %s94, 1
        %s517 = smul.addr %s516, 8
        %s518 = scalar_lea.vmem [#allocation7], %s517
        %p519 = pneg %p107
        %p520 = pneg %p104
        %p521 = pneg %p128
        %p522 = pneg %p125
        %p523 = pneg %p149
        %p524 = pneg %p146
        %p525 = pneg %p170
        %p526 = pneg %p167
        %p527 = pneg %p191
        %p528 = pneg %p188
        %p529 = pneg %p212
        %p530 = pneg %p209
        %p531 = pneg %p233
        %p532 = pneg %p230
        %p533 = pneg %p254
        %p534 = pneg %p251
        %p535 = pneg %p275
        %p536 = pneg %p272
        %p537 = pneg %p301
        %p538 = pneg %p298
        %s539 = sand.u32 %s288, 1
        %s540 = scalar_lea.sflag [#allocation4], %s539
        %s541 = sand.u32 %s288, 1
        %s542 = smul.addr %s541, 8
        %s543 = scalar_lea.vmem [#allocation16], %s542
        %v544 = vld [vmem:[%s457] sm:$0xff]
        %v545 = vld [vmem:[%s466] sm:$0xff]
        %v546 = vld [vmem:[%s475] sm:$0xff]
        %v547 = vld [vmem:[#allocation8] sm:$0xff]
        %v548 = vld [vmem:[#allocation8 + $0x8] sm:$0xff]
        %v549 = vld [vmem:[#allocation8 + $0x10] sm:$0xff]
        %v550 = vld [vmem:[#allocation8 + $0x18] sm:$0xff]
        %vm551 = vcmask 261120
        %v553 = vsel %vm551, %v544, 0
        %555 = vmatprep.subr.mxu0 0.0
        %556 = vmatpush1.msra.mxu0 %v547
        %557 = vmatprep.subr.mxu0 0.0
        %558 = vmatpush1.msra.mxu0 %v548
        %559 = vmatprep.subr.mxu0 0.0
        %560 = vmatpush1.msra.mxu0 %v549
        %561 = vmatprep.subr.mxu0 0.0
        %562 = vmatpush1.msra.mxu0 %v550
        %563 = vmatprep.subr.mxu0 0.0
        %564 = vmatpush1.msra.mxu0 0.0
        %565 = vmatprep.subr.mxu0 0.0
        %566 = vmatpush1.msra.mxu0 0.0
        %567 = vmatprep.subr.mxu0 0.0
        %568 = vmatpush1.msra.mxu0 0.0
        %569 = vmatprep.subr.mxu0 0.0
        %570 = vmatpush1.msra.mxu0 0.0
        %571 = vmatprep.subr.mxu0 0.0
        %572 = vmatpush1.msra.mxu0 0.0
        %573 = vmatprep.subr.mxu0 0.0
        %574 = vmatpush1.msra.mxu0 0.0
        %575 = vmatprep.subr.mxu0 0.0
        %576 = vmatpush1.msra.mxu0 0.0
        %577 = vmatprep.subr.mxu0 0.0
        %578 = vmatpush1.msra.mxu0 0.0
        %579 = vmatprep.subr.mxu0 0.0
        %580 = vmatpush1.msra.mxu0 0.0
        %581 = vmatprep.subr.mxu0 0.0
        %582 = vmatpush1.msra.mxu0 0.0
        %583 = vmatprep.subr.mxu0 0.0
        %584 = vmatpush1.msra.mxu0 0.0
        %585 = vmatprep.subr.mxu0 0.0
        %586 = vmatpush1.msra.mxu0 0.0
        %587 = vmatprep.subr.mxu0 0.0
        %588 = vmatpush1.msra.mxu0 0.0
        %589 = vmatprep.subr.mxu0 0.0
        %590 = vmatpush1.msra.mxu0 0.0
        %591 = vmatprep.subr.mxu0 0.0
        %592 = vmatpush1.msra.mxu0 0.0
        %593 = vmatprep.subr.mxu0 0.0
        %594 = vmatpush1.msra.mxu0 0.0
        %595 = vmatprep.subr.mxu0 0.0
        %596 = vmatpush1.msra.mxu0 0.0
        %597 = vmatprep.subr.mxu0 0.0
        %598 = vmatpush1.msra.mxu0 0.0
        %599 = vmatprep.subr.mxu0 0.0
        %600 = vmatpush1.msra.mxu0 0.0
        %601 = vmatprep.subr.mxu0 0.0
        %602 = vmatpush1.msra.mxu0 0.0
        %603 = vmatprep.subr.mxu0 0.0
        %604 = vmatpush1.msra.mxu0 0.0
        %605 = vmatprep.subr.mxu0 0.0
        %606 = vmatpush1.msra.mxu0 0.0
        %607 = vmatprep.subr.mxu0 0.0
        %608 = vmatpush1.msra.mxu0 0.0
        %609 = vmatprep.subr.mxu0 0.0
        %610 = vmatpush1.msra.mxu0 0.0
        %611 = vmatprep.subr.mxu0 0.0
        %612 = vmatpush1.msra.mxu0 0.0
        %613 = vmatprep.subr.mxu0 0.0
        %614 = vmatpush1.msra.mxu0 0.0
        %615 = vmatprep.subr.mxu0 0.0
        %616 = vmatpush1.msra.mxu0 0.0
        %617 = vmatprep.subr.mxu0 0.0
        %618 = vmatpush1.msra.mxu0 0.0
        %619 = vmatprep.mubr.f32.mxu0 0.0
        %620 = vmatmul.mubr.f32.gmra.mrb[0].mxu0 %v553
        %v621 = vpop.f32.mrb[0].mxu0
        %v622 = vadd.f32 0.0, %v621
        %v623 = vpop.f32.mrb[0].mxu0
        %624 = vdwg.mxu0
        %v625 = vld [vmem:[#allocation10] sm:$0xff]
        %v626 = vld [vmem:[#allocation10 + $0x8] sm:$0xff]
        %v627 = vld [vmem:[#allocation10 + $0x10] sm:$0xff]
        %v628 = vld [vmem:[#allocation10 + $0x18] sm:$0xff]
        %v630 = vsel %vm551, %v545, 0
        %632 = vmatprep.subr.mxu0 0.0
        %633 = vmatpush1.msra.mxu0 %v625
        %634 = vmatprep.subr.mxu0 0.0
        %635 = vmatpush1.msra.mxu0 %v626
        %636 = vmatprep.subr.mxu0 0.0
        %637 = vmatpush1.msra.mxu0 %v627
        %638 = vmatprep.subr.mxu0 0.0
        %639 = vmatpush1.msra.mxu0 %v628
        %640 = vmatprep.subr.mxu0 0.0
        %641 = vmatpush1.msra.mxu0 0.0
        %642 = vmatprep.subr.mxu0 0.0
        %643 = vmatpush1.msra.mxu0 0.0
        %644 = vmatprep.subr.mxu0 0.0
        %645 = vmatpush1.msra.mxu0 0.0
        %646 = vmatprep.subr.mxu0 0.0
        %647 = vmatpush1.msra.mxu0 0.0
        %648 = vmatprep.subr.mxu0 0.0
        %649 = vmatpush1.msra.mxu0 0.0
        %650 = vmatprep.subr.mxu0 0.0
        %651 = vmatpush1.msra.mxu0 0.0
        %652 = vmatprep.subr.mxu0 0.0
        %653 = vmatpush1.msra.mxu0 0.0
        %654 = vmatprep.subr.mxu0 0.0
        %655 = vmatpush1.msra.mxu0 0.0
        %656 = vmatprep.subr.mxu0 0.0
        %657 = vmatpush1.msra.mxu0 0.0
        %658 = vmatprep.subr.mxu0 0.0
        %659 = vmatpush1.msra.mxu0 0.0
        %660 = vmatprep.subr.mxu0 0.0
        %661 = vmatpush1.msra.mxu0 0.0
        %662 = vmatprep.subr.mxu0 0.0
        %663 = vmatpush1.msra.mxu0 0.0
        %664 = vmatprep.subr.mxu0 0.0
        %665 = vmatpush1.msra.mxu0 0.0
        %666 = vmatprep.subr.mxu0 0.0
        %667 = vmatpush1.msra.mxu0 0.0
        %668 = vmatprep.subr.mxu0 0.0
        %669 = vmatpush1.msra.mxu0 0.0
        %670 = vmatprep.subr.mxu0 0.0
        %671 = vmatpush1.msra.mxu0 0.0
        %672 = vmatprep.subr.mxu0 0.0
        %673 = vmatpush1.msra.mxu0 0.0
        %674 = vmatprep.subr.mxu0 0.0
        %675 = vmatpush1.msra.mxu0 0.0
        %676 = vmatprep.subr.mxu0 0.0
        %677 = vmatpush1.msra.mxu0 0.0
        %678 = vmatprep.subr.mxu0 0.0
        %679 = vmatpush1.msra.mxu0 0.0
        %680 = vmatprep.subr.mxu0 0.0
        %681 = vmatpush1.msra.mxu0 0.0
        %682 = vmatprep.subr.mxu0 0.0
        %683 = vmatpush1.msra.mxu0 0.0
        %684 = vmatprep.subr.mxu0 0.0
        %685 = vmatpush1.msra.mxu0 0.0
        %686 = vmatprep.subr.mxu0 0.0
        %687 = vmatpush1.msra.mxu0 0.0
        %688 = vmatprep.subr.mxu0 0.0
        %689 = vmatpush1.msra.mxu0 0.0
        %690 = vmatprep.subr.mxu0 0.0
        %691 = vmatpush1.msra.mxu0 0.0
        %692 = vmatprep.subr.mxu0 0.0
        %693 = vmatpush1.msra.mxu0 0.0
        %694 = vmatprep.subr.mxu0 0.0
        %695 = vmatpush1.msra.mxu0 0.0
        %696 = vmatprep.mubr.f32.mxu0 0.0
        %697 = vmatmul.mubr.f32.gmra.mrb[0].mxu0 %v630
        %v698 = vpop.f32.mrb[0].mxu0
        %v699 = vadd.f32 0.0, %v698
        %v700 = vpop.f32.mrb[0].mxu0
        %701 = vdwg.mxu0
        %v702 = vld [vmem:[#allocation11] sm:$0xff]
        %v703 = vld [vmem:[#allocation11 + $0x8] sm:$0xff]
        %v704 = vld [vmem:[#allocation11 + $0x10] sm:$0xff]
        %v705 = vld [vmem:[#allocation11 + $0x18] sm:$0xff]
        %v707 = vsel %vm551, %v546, 0
        %709 = vmatprep.subr.mxu0 0.0
        %710 = vmatpush1.msra.mxu0 %v702
        %711 = vmatprep.subr.mxu0 0.0
        %712 = vmatpush1.msra.mxu0 %v703
        %713 = vmatprep.subr.mxu0 0.0
        %714 = vmatpush1.msra.mxu0 %v704
        %715 = vmatprep.subr.mxu0 0.0
        %716 = vmatpush1.msra.mxu0 %v705
        %717 = vmatprep.subr.mxu0 0.0
        %718 = vmatpush1.msra.mxu0 0.0
        %719 = vmatprep.subr.mxu0 0.0
        %720 = vmatpush1.msra.mxu0 0.0
        %721 = vmatprep.subr.mxu0 0.0
        %722 = vmatpush1.msra.mxu0 0.0
        %723 = vmatprep.subr.mxu0 0.0
        %724 = vmatpush1.msra.mxu0 0.0
        %725 = vmatprep.subr.mxu0 0.0
        %726 = vmatpush1.msra.mxu0 0.0
        %727 = vmatprep.subr.mxu0 0.0
        %728 = vmatpush1.msra.mxu0 0.0
        %729 = vmatprep.subr.mxu0 0.0
        %730 = vmatpush1.msra.mxu0 0.0
        %731 = vmatprep.subr.mxu0 0.0
        %732 = vmatpush1.msra.mxu0 0.0
        %733 = vmatprep.subr.mxu0 0.0
        %734 = vmatpush1.msra.mxu0 0.0
        %735 = vmatprep.subr.mxu0 0.0
        %736 = vmatpush1.msra.mxu0 0.0
        %737 = vmatprep.subr.mxu0 0.0
        %738 = vmatpush1.msra.mxu0 0.0
        %739 = vmatprep.subr.mxu0 0.0
        %740 = vmatpush1.msra.mxu0 0.0
        %741 = vmatprep.subr.mxu0 0.0
        %742 = vmatpush1.msra.mxu0 0.0
        %743 = vmatprep.subr.mxu0 0.0
        %744 = vmatpush1.msra.mxu0 0.0
        %745 = vmatprep.subr.mxu0 0.0
        %746 = vmatpush1.msra.mxu0 0.0
        %747 = vmatprep.subr.mxu0 0.0
        %748 = vmatpush1.msra.mxu0 0.0
        %749 = vmatprep.subr.mxu0 0.0
        %750 = vmatpush1.msra.mxu0 0.0
        %751 = vmatprep.subr.mxu0 0.0
        %752 = vmatpush1.msra.mxu0 0.0
        %753 = vmatprep.subr.mxu0 0.0
        %754 = vmatpush1.msra.mxu0 0.0
        %755 = vmatprep.subr.mxu0 0.0
        %756 = vmatpush1.msra.mxu0 0.0
        %757 = vmatprep.subr.mxu0 0.0
        %758 = vmatpush1.msra.mxu0 0.0
        %759 = vmatprep.subr.mxu0 0.0
        %760 = vmatpush1.msra.mxu0 0.0
        %761 = vmatprep.subr.mxu0 0.0
        %762 = vmatpush1.msra.mxu0 0.0
        %763 = vmatprep.subr.mxu0 0.0
        %764 = vmatpush1.msra.mxu0 0.0
        %765 = vmatprep.subr.mxu0 0.0
        %766 = vmatpush1.msra.mxu0 0.0
        %767 = vmatprep.subr.mxu0 0.0
        %768 = vmatpush1.msra.mxu0 0.0
        %769 = vmatprep.subr.mxu0 0.0
        %770 = vmatpush1.msra.mxu0 0.0
        %771 = vmatprep.subr.mxu0 0.0
        %772 = vmatpush1.msra.mxu0 0.0
        %773 = vmatprep.mubr.f32.mxu0 0.0
        %774 = vmatmul.mubr.f32.gmra.mrb[0].mxu0 %v707
        %v775 = vpop.f32.mrb[0].mxu0
        %v776 = vadd.f32 0.0, %v775
        %v777 = vpop.f32.mrb[0].mxu0
        %778 = vdwg.mxu0
        %v779 = vld [vmem:[#allocation14] sm:$0xff]
        %v780 = vld [vmem:[%s10] sm:$0xff]
        %v781 = vld [vmem:[%s8] sm:$0xff]
        %v782 = vld [vmem:[%s8 + $0x8] sm:$0xff]
        %v783 = vld [vmem:[%s8 + $0x10] sm:$0xff]
        %v784 = vld [vmem:[%s8 + $0x18] sm:$0xff]
        %v785 = vmul.f32 %v622, %v779
        %v787 = vsel %vm551, %v622, 0
        %789 = vmatprep.subr.mxu0 0.0
        %790 = vmatpush1.msra.mxu0 %v781
        %791 = vmatprep.subr.mxu0 0.0
        %792 = vmatpush1.msra.mxu0 %v782
        %793 = vmatprep.subr.mxu0 0.0
        %794 = vmatpush1.msra.mxu0 %v783
        %795 = vmatprep.subr.mxu0 0.0
        %796 = vmatpush1.msra.mxu0 %v784
        %797 = vmatprep.subr.mxu0 0.0
        %798 = vmatpush1.msra.mxu0 0.0
        %799 = vmatprep.subr.mxu0 0.0
        %800 = vmatpush1.msra.mxu0 0.0
        %801 = vmatprep.subr.mxu0 0.0
        %802 = vmatpush1.msra.mxu0 0.0
        %803 = vmatprep.subr.mxu0 0.0
        %804 = vmatpush1.msra.mxu0 0.0
        %805 = vmatprep.subr.mxu0 0.0
        %806 = vmatpush1.msra.mxu0 0.0
        %807 = vmatprep.subr.mxu0 0.0
        %808 = vmatpush1.msra.mxu0 0.0
        %809 = vmatprep.subr.mxu0 0.0
        %810 = vmatpush1.msra.mxu0 0.0
        %811 = vmatprep.subr.mxu0 0.0
        %812 = vmatpush1.msra.mxu0 0.0
        %813 = vmatprep.subr.mxu0 0.0
        %814 = vmatpush1.msra.mxu0 0.0
        %815 = vmatprep.subr.mxu0 0.0
        %816 = vmatpush1.msra.mxu0 0.0
        %817 = vmatprep.subr.mxu0 0.0
        %818 = vmatpush1.msra.mxu0 0.0
        %819 = vmatprep.subr.mxu0 0.0
        %820 = vmatpush1.msra.mxu0 0.0
        %821 = vmatprep.subr.mxu0 0.0
        %822 = vmatpush1.msra.mxu0 0.0
        %823 = vmatprep.subr.mxu0 0.0
        %824 = vmatpush1.msra.mxu0 0.0
        %825 = vmatprep.subr.mxu0 0.0
        %826 = vmatpush1.msra.mxu0 0.0
        %827 = vmatprep.subr.mxu0 0.0
        %828 = vmatpush1.msra.mxu0 0.0
        %829 = vmatprep.subr.mxu0 0.0
        %830 = vmatpush1.msra.mxu0 0.0
        %831 = vmatprep.subr.mxu0 0.0
        %832 = vmatpush1.msra.mxu0 0.0
        %833 = vmatprep.subr.mxu0 0.0
        %834 = vmatpush1.msra.mxu0 0.0
        %835 = vmatprep.subr.mxu0 0.0
        %836 = vmatpush1.msra.mxu0 0.0
        %837 = vmatprep.subr.mxu0 0.0
        %838 = vmatpush1.msra.mxu0 0.0
        %839 = vmatprep.subr.mxu0 0.0
        %840 = vmatpush1.msra.mxu0 0.0
        %841 = vmatprep.subr.mxu0 0.0
        %842 = vmatpush1.msra.mxu0 0.0
        %843 = vmatprep.subr.mxu0 0.0
        %844 = vmatpush1.msra.mxu0 0.0
        %845 = vmatprep.subr.mxu0 0.0
        %846 = vmatpush1.msra.mxu0 0.0
        %847 = vmatprep.subr.mxu0 0.0
        %848 = vmatpush1.msra.mxu0 0.0
        %849 = vmatprep.subr.mxu0 0.0
        %850 = vmatpush1.msra.mxu0 0.0
        %851 = vmatprep.subr.mxu0 0.0
        %852 = vmatpush1.msra.mxu0 0.0
        %853 = vmatprep.mubr.f32.mxu0 0.0
        %854 = vmatmul.mubr.f32.gmra.mrb[0].mxu0 %v787
        %v855 = vpop.f32.mrb[0].mxu0
        %v856 = vadd.f32 0.0, %v855
        %v857 = vpop.f32.mrb[0].mxu0
        %858 = vdwg.mxu0
        %v859 = vmul.f32 %v856, %v780
        %v860 = vadd.f32 %v785, %v859
        %v861 = vmul.f32 %v699, %v779
        %v863 = vsel %vm551, %v699, 0
        %865 = vmatprep.subr.mxu0 0.0
        %866 = vmatpush1.msra.mxu0 %v781
        %867 = vmatprep.subr.mxu0 0.0
        %868 = vmatpush1.msra.mxu0 %v782
        %869 = vmatprep.subr.mxu0 0.0
        %870 = vmatpush1.msra.mxu0 %v783
        %871 = vmatprep.subr.mxu0 0.0
        %872 = vmatpush1.msra.mxu0 %v784
        %873 = vmatprep.subr.mxu0 0.0
        %874 = vmatpush1.msra.mxu0 0.0
        %875 = vmatprep.subr.mxu0 0.0
        %876 = vmatpush1.msra.mxu0 0.0
        %877 = vmatprep.subr.mxu0 0.0
        %878 = vmatpush1.msra.mxu0 0.0
        %879 = vmatprep.subr.mxu0 0.0
        %880 = vmatpush1.msra.mxu0 0.0
        %881 = vmatprep.subr.mxu0 0.0
        %882 = vmatpush1.msra.mxu0 0.0
        %883 = vmatprep.subr.mxu0 0.0
        %884 = vmatpush1.msra.mxu0 0.0
        %885 = vmatprep.subr.mxu0 0.0
        %886 = vmatpush1.msra.mxu0 0.0
        %887 = vmatprep.subr.mxu0 0.0
        %888 = vmatpush1.msra.mxu0 0.0
        %889 = vmatprep.subr.mxu0 0.0
        %890 = vmatpush1.msra.mxu0 0.0
        %891 = vmatprep.subr.mxu0 0.0
        %892 = vmatpush1.msra.mxu0 0.0
        %893 = vmatprep.subr.mxu0 0.0
        %894 = vmatpush1.msra.mxu0 0.0
        %895 = vmatprep.subr.mxu0 0.0
        %896 = vmatpush1.msra.mxu0 0.0
        %897 = vmatprep.subr.mxu0 0.0
        %898 = vmatpush1.msra.mxu0 0.0
        %899 = vmatprep.subr.mxu0 0.0
        %900 = vmatpush1.msra.mxu0 0.0
        %901 = vmatprep.subr.mxu0 0.0
        %902 = vmatpush1.msra.mxu0 0.0
        %903 = vmatprep.subr.mxu0 0.0
        %904 = vmatpush1.msra.mxu0 0.0
        %905 = vmatprep.subr.mxu0 0.0
        %906 = vmatpush1.msra.mxu0 0.0
        %907 = vmatprep.subr.mxu0 0.0
        %908 = vmatpush1.msra.mxu0 0.0
        %909 = vmatprep.subr.mxu0 0.0
        %910 = vmatpush1.msra.mxu0 0.0
        %911 = vmatprep.subr.mxu0 0.0
        %912 = vmatpush1.msra.mxu0 0.0
        %913 = vmatprep.subr.mxu0 0.0
        %914 = vmatpush1.msra.mxu0 0.0
        %915 = vmatprep.subr.mxu0 0.0
        %916 = vmatpush1.msra.mxu0 0.0
        %917 = vmatprep.subr.mxu0 0.0
        %918 = vmatpush1.msra.mxu0 0.0
        %919 = vmatprep.subr.mxu0 0.0
        %920 = vmatpush1.msra.mxu0 0.0
        %921 = vmatprep.subr.mxu0 0.0
        %922 = vmatpush1.msra.mxu0 0.0
        %923 = vmatprep.subr.mxu0 0.0
        %924 = vmatpush1.msra.mxu0 0.0
        %925 = vmatprep.subr.mxu0 0.0
        %926 = vmatpush1.msra.mxu0 0.0
        %927 = vmatprep.subr.mxu0 0.0
        %928 = vmatpush1.msra.mxu0 0.0
        %929 = vmatprep.mubr.f32.mxu0 0.0
        %930 = vmatmul.mubr.f32.gmra.mrb[0].mxu0 %v863
        %v931 = vpop.f32.mrb[0].mxu0
        %v932 = vadd.f32 0.0, %v931
        %v933 = vpop.f32.mrb[0].mxu0
        %934 = vdwg.mxu0
        %v935 = vmul.f32 %v932, %v780
        %v936 = vadd.f32 %v861, %v935
        %v937 = vld [vmem:[%s7] sm:$0x1]
        %vm938 = vcmask 64512
        %v940 = vsel %vm938, %v860, 0
        %v943 = vsel %vm938, %v936, 0
        %945 = vmatprep.subr.mxu0 0.0
        %946 = vmatpush1.xpose.msra.mxu0 %v943
        %947 = vmatprep.subr.mxu0 0.0
        %948 = vmatpush1.xpose.msra.mxu0 0.0
        %949 = vmatprep.subr.mxu0 0.0
        %950 = vmatpush1.xpose.msra.mxu0 0.0
        %951 = vmatprep.subr.mxu0 0.0
        %952 = vmatpush1.xpose.msra.mxu0 0.0
        %953 = vmatprep.subr.mxu0 0.0
        %954 = vmatpush1.xpose.msra.mxu0 0.0
        %955 = vmatprep.subr.mxu0 0.0
        %956 = vmatpush1.xpose.msra.mxu0 0.0
        %957 = vmatprep.subr.mxu0 0.0
        %958 = vmatpush1.xpose.msra.mxu0 0.0
        %959 = vmatprep.subr.mxu0 0.0
        %960 = vmatpush1.xpose.msra.mxu0 0.0
        %961 = vmatprep.subr.mxu0 0.0
        %962 = vmatpush1.xpose.msra.mxu0 0.0
        %963 = vmatprep.subr.mxu0 0.0
        %964 = vmatpush1.xpose.msra.mxu0 0.0
        %965 = vmatprep.subr.mxu0 0.0
        %966 = vmatpush1.xpose.msra.mxu0 0.0
        %967 = vmatprep.subr.mxu0 0.0
        %968 = vmatpush1.xpose.msra.mxu0 0.0
        %969 = vmatprep.subr.mxu0 0.0
        %970 = vmatpush1.xpose.msra.mxu0 0.0
        %971 = vmatprep.subr.mxu0 0.0
        %972 = vmatpush1.xpose.msra.mxu0 0.0
        %973 = vmatprep.subr.mxu0 0.0
        %974 = vmatpush1.xpose.msra.mxu0 0.0
        %975 = vmatprep.subr.mxu0 0.0
        %976 = vmatpush1.xpose.msra.mxu0 0.0
        %977 = vmatprep.subr.mxu0 0.0
        %978 = vmatpush1.xpose.msra.mxu0 0.0
        %979 = vmatprep.subr.mxu0 0.0
        %980 = vmatpush1.xpose.msra.mxu0 0.0
        %981 = vmatprep.subr.mxu0 0.0
        %982 = vmatpush1.xpose.msra.mxu0 0.0
        %983 = vmatprep.subr.mxu0 0.0
        %984 = vmatpush1.xpose.msra.mxu0 0.0
        %985 = vmatprep.subr.mxu0 0.0
        %986 = vmatpush1.xpose.msra.mxu0 0.0
        %987 = vmatprep.subr.mxu0 0.0
        %988 = vmatpush1.xpose.msra.mxu0 0.0
        %989 = vmatprep.subr.mxu0 0.0
        %990 = vmatpush1.xpose.msra.mxu0 0.0
        %991 = vmatprep.subr.mxu0 0.0
        %992 = vmatpush1.xpose.msra.mxu0 0.0
        %993 = vmatprep.subr.mxu0 0.0
        %994 = vmatpush1.xpose.msra.mxu0 0.0
        %995 = vmatprep.subr.mxu0 0.0
        %996 = vmatpush1.xpose.msra.mxu0 0.0
        %997 = vmatprep.subr.mxu0 0.0
        %998 = vmatpush1.xpose.msra.mxu0 0.0
        %999 = vmatprep.subr.mxu0 0.0
        %1000 = vmatpush1.xpose.msra.mxu0 0.0
        %1001 = vmatprep.subr.mxu0 0.0
        %1002 = vmatpush1.xpose.msra.mxu0 0.0
        %1003 = vmatprep.subr.mxu0 0.0
        %1004 = vmatpush1.xpose.msra.mxu0 0.0
        %1005 = vmatprep.subr.mxu0 0.0
        %1006 = vmatpush1.xpose.msra.mxu0 0.0
        %1007 = vmatprep.subr.mxu0 0.0
        %1008 = vmatpush1.xpose.msra.mxu0 0.0
        %1009 = vmatprep.mubr.f32.mxu0 0.0
        %1010 = vmatmul.mubr.f32.gmra.mrb[0].mxu0 %v940
        %v1011 = vpop.f32.mrb[0].mxu0
        %v1012 = vadd.f32 0.0, %v1011
        %v1013 = vpop.f32.mrb[0].mxu0
        %1014 = vdwg.mxu0
        %v1015 = vmul.f32 %v1012, 0.35355338
        %v1016 = vsel %vm938, %v1015, -inf
        %1017 = vmax.xlane.f32.xlu0 %v1016
        %v1018 = vpop.xlane.xlu0 %1017
        %v1019 = vsub.f32 %v1015, %v1018
        %v1020 = vmul.f32 %v1019, 1.442695
        %v1021 = vpow.pop %v1020
        %v1022 = vsel %vm938, %v1021, 0.0
        %1023 = vadd.xlane.f32.xlu0 %v1022
        %v1024 = vpop.xlane.xlu0 %1023
        %v1025 = vrcp.pop %v1024
        %v1026 = vmul.f32 %v1024, %v1025
        %v1027 = vsub.f32 2.0, %v1026
        %v1028 = vmul.f32 %v1025, %v1027
        %v1029 = vmul.f32 %v1021, %v1028
        %v1031 = vsel %vm938, %v1029, 0
        %1033 = vmatprep.subr.mxu0 0.0
        %1034 = vmatpush1.msra.mxu0 %v776
        %1035 = vmatprep.subr.mxu0 0.0
        %1036 = vmatpush1.msra.mxu0 0.0
        %1037 = vmatprep.subr.mxu0 0.0
        %1038 = vmatpush1.msra.mxu0 0.0
        %1039 = vmatprep.subr.mxu0 0.0
        %1040 = vmatpush1.msra.mxu0 0.0
        %1041 = vmatprep.subr.mxu0 0.0
        %1042 = vmatpush1.msra.mxu0 0.0
        %1043 = vmatprep.subr.mxu0 0.0
        %1044 = vmatpush1.msra.mxu0 0.0
        %1045 = vmatprep.subr.mxu0 0.0
        %1046 = vmatpush1.msra.mxu0 0.0
        %1047 = vmatprep.subr.mxu0 0.0
        %1048 = vmatpush1.msra.mxu0 0.0
        %1049 = vmatprep.subr.mxu0 0.0
        %1050 = vmatpush1.msra.mxu0 0.0
        %1051 = vmatprep.subr.mxu0 0.0
        %1052 = vmatpush1.msra.mxu0 0.0
        %1053 = vmatprep.subr.mxu0 0.0
        %1054 = vmatpush1.msra.mxu0 0.0
        %1055 = vmatprep.subr.mxu0 0.0
        %1056 = vmatpush1.msra.mxu0 0.0
        %1057 = vmatprep.subr.mxu0 0.0
        %1058 = vmatpush1.msra.mxu0 0.0
        %1059 = vmatprep.subr.mxu0 0.0
        %1060 = vmatpush1.msra.mxu0 0.0
        %1061 = vmatprep.subr.mxu0 0.0
        %1062 = vmatpush1.msra.mxu0 0.0
        %1063 = vmatprep.subr.mxu0 0.0
        %1064 = vmatpush1.msra.mxu0 0.0
        %1065 = vmatprep.subr.mxu0 0.0
        %1066 = vmatpush1.msra.mxu0 0.0
        %1067 = vmatprep.subr.mxu0 0.0
        %1068 = vmatpush1.msra.mxu0 0.0
        %1069 = vmatprep.subr.mxu0 0.0
        %1070 = vmatpush1.msra.mxu0 0.0
        %1071 = vmatprep.subr.mxu0 0.0
        %1072 = vmatpush1.msra.mxu0 0.0
        %1073 = vmatprep.subr.mxu0 0.0
        %1074 = vmatpush1.msra.mxu0 0.0
        %1075 = vmatprep.subr.mxu0 0.0
        %1076 = vmatpush1.msra.mxu0 0.0
        %1077 = vmatprep.subr.mxu0 0.0
        %1078 = vmatpush1.msra.mxu0 0.0
        %1079 = vmatprep.subr.mxu0 0.0
        %1080 = vmatpush1.msra.mxu0 0.0
        %1081 = vmatprep.subr.mxu0 0.0
        %1082 = vmatpush1.msra.mxu0 0.0
        %1083 = vmatprep.subr.mxu0 0.0
        %1084 = vmatpush1.msra.mxu0 0.0
        %1085 = vmatprep.subr.mxu0 0.0
        %1086 = vmatpush1.msra.mxu0 0.0
        %1087 = vmatprep.subr.mxu0 0.0
        %1088 = vmatpush1.msra.mxu0 0.0
        %1089 = vmatprep.subr.mxu0 0.0
        %1090 = vmatpush1.msra.mxu0 0.0
        %1091 = vmatprep.subr.mxu0 0.0
        %1092 = vmatpush1.msra.mxu0 0.0
        %1093 = vmatprep.subr.mxu0 0.0
        %1094 = vmatpush1.msra.mxu0 0.0
        %1095 = vmatprep.subr.mxu0 0.0
        %1096 = vmatpush1.msra.mxu0 0.0
        %1097 = vmatprep.mubr.f32.mxu0 0.0
        %1098 = vmatmul.mubr.f32.gmra.mrb[0].mxu0 %v1031
        %v1099 = vpop.f32.mrb[0].mxu0
        %v1100 = vadd.f32 0.0, %v1099
        %v1101 = vpop.f32.mrb[0].mxu0
        %1102 = vdwg.mxu0
        %v1103 = vld [vmem:[#allocation13] sm:$0xff]
        %1104 = vrot.lane.b32.xlu0 %v860, 120
        %v1105 = vpop.permute.xlu0 %1104
        %1106 = vrot.lane.b32.xlu0 %v936, 120
        %v1107 = vpop.permute.xlu0 %1106
        %v1108 = vsel %vm938, %v1105, 0
        %v1110 = vsel %vm938, %v1107, 0
        %1112 = vmatprep.subr.mxu0 0.0
        %1113 = vmatpush1.xpose.msra.mxu0 %v1110
        %1114 = vmatprep.subr.mxu0 0.0
        %1115 = vmatpush1.xpose.msra.mxu0 0.0
        %1116 = vmatprep.subr.mxu0 0.0
        %1117 = vmatpush1.xpose.msra.mxu0 0.0
        %1118 = vmatprep.subr.mxu0 0.0
        %1119 = vmatpush1.xpose.msra.mxu0 0.0
        %1120 = vmatprep.subr.mxu0 0.0
        %1121 = vmatpush1.xpose.msra.mxu0 0.0
        %1122 = vmatprep.subr.mxu0 0.0
        %1123 = vmatpush1.xpose.msra.mxu0 0.0
        %1124 = vmatprep.subr.mxu0 0.0
        %1125 = vmatpush1.xpose.msra.mxu0 0.0
        %1126 = vmatprep.subr.mxu0 0.0
        %1127 = vmatpush1.xpose.msra.mxu0 0.0
        %1128 = vmatprep.subr.mxu0 0.0
        %1129 = vmatpush1.xpose.msra.mxu0 0.0
        %1130 = vmatprep.subr.mxu0 0.0
        %1131 = vmatpush1.xpose.msra.mxu0 0.0
        %1132 = vmatprep.subr.mxu0 0.0
        %1133 = vmatpush1.xpose.msra.mxu0 0.0
        %1134 = vmatprep.subr.mxu0 0.0
        %1135 = vmatpush1.xpose.msra.mxu0 0.0
        %1136 = vmatprep.subr.mxu0 0.0
        %1137 = vmatpush1.xpose.msra.mxu0 0.0
        %1138 = vmatprep.subr.mxu0 0.0
        %1139 = vmatpush1.xpose.msra.mxu0 0.0
        %1140 = vmatprep.subr.mxu0 0.0
        %1141 = vmatpush1.xpose.msra.mxu0 0.0
        %1142 = vmatprep.subr.mxu0 0.0
        %1143 = vmatpush1.xpose.msra.mxu0 0.0
        %1144 = vmatprep.subr.mxu0 0.0
        %1145 = vmatpush1.xpose.msra.mxu0 0.0
        %1146 = vmatprep.subr.mxu0 0.0
        %1147 = vmatpush1.xpose.msra.mxu0 0.0
        %1148 = vmatprep.subr.mxu0 0.0
        %1149 = vmatpush1.xpose.msra.mxu0 0.0
        %1150 = vmatprep.subr.mxu0 0.0
        %1151 = vmatpush1.xpose.msra.mxu0 0.0
        %1152 = vmatprep.subr.mxu0 0.0
        %1153 = vmatpush1.xpose.msra.mxu0 0.0
        %1154 = vmatprep.subr.mxu0 0.0
        %1155 = vmatpush1.xpose.msra.mxu0 0.0
        %1156 = vmatprep.subr.mxu0 0.0
        %1157 = vmatpush1.xpose.msra.mxu0 0.0
        %1158 = vmatprep.subr.mxu0 0.0
        %1159 = vmatpush1.xpose.msra.mxu0 0.0
        %1160 = vmatprep.subr.mxu0 0.0
        %1161 = vmatpush1.xpose.msra.mxu0 0.0
        %1162 = vmatprep.subr.mxu0 0.0
        %1163 = vmatpush1.xpose.msra.mxu0 0.0
        %1164 = vmatprep.subr.mxu0 0.0
        %1165 = vmatpush1.xpose.msra.mxu0 0.0
        %1166 = vmatprep.subr.mxu0 0.0
        %1167 = vmatpush1.xpose.msra.mxu0 0.0
        %1168 = vmatprep.subr.mxu0 0.0
        %1169 = vmatpush1.xpose.msra.mxu0 0.0
        %1170 = vmatprep.subr.mxu0 0.0
        %1171 = vmatpush1.xpose.msra.mxu0 0.0
        %1172 = vmatprep.subr.mxu0 0.0
        %1173 = vmatpush1.xpose.msra.mxu0 0.0
        %1174 = vmatprep.subr.mxu0 0.0
        %1175 = vmatpush1.xpose.msra.mxu0 0.0
        %1176 = vmatprep.mubr.f32.mxu0 0.0
        %1177 = vmatmul.mubr.f32.gmra.mrb[0].mxu0 %v1108
        %v1178 = vpop.f32.mrb[0].mxu0
        %v1179 = vadd.f32 0.0, %v1178
        %v1180 = vpop.f32.mrb[0].mxu0
        %1181 = vdwg.mxu0
        %v1182 = vmul.f32 %v1179, 0.35355338
        %v1183 = vsel %vm938, %v1182, -inf
        %1184 = vmax.xlane.f32.xlu0 %v1183
        %v1185 = vpop.xlane.xlu0 %1184
        %v1186 = vsub.f32 %v1182, %v1185
        %v1187 = vmul.f32 %v1186, 1.442695
        %v1188 = vpow.pop %v1187
        %v1189 = vsel %vm938, %v1188, 0.0
        %1190 = vadd.xlane.f32.xlu0 %v1189
        %v1191 = vpop.xlane.xlu0 %1190
        %v1192 = vrcp.pop %v1191
        %v1193 = vmul.f32 %v1191, %v1192
        %v1194 = vsub.f32 2.0, %v1193
        %v1195 = vmul.f32 %v1192, %v1194
        %v1196 = vmul.f32 %v1188, %v1195
        %1198 = vrot.lane.b32.xlu0 %v776, 120
        %v1199 = vpop.permute.xlu0 %1198
        %v1202 = vsel %vm938, %v1196, 0
        %1204 = vmatprep.subr.mxu0 0.0
        %1205 = vmatpush1.msra.mxu0 %v1199
        %1206 = vmatprep.subr.mxu0 0.0
        %1207 = vmatpush1.msra.mxu0 0.0
        %1208 = vmatprep.subr.mxu0 0.0
        %1209 = vmatpush1.msra.mxu0 0.0
        %1210 = vmatprep.subr.mxu0 0.0
        %1211 = vmatpush1.msra.mxu0 0.0
        %1212 = vmatprep.subr.mxu0 0.0
        %1213 = vmatpush1.msra.mxu0 0.0
        %1214 = vmatprep.subr.mxu0 0.0
        %1215 = vmatpush1.msra.mxu0 0.0
        %1216 = vmatprep.subr.mxu0 0.0
        %1217 = vmatpush1.msra.mxu0 0.0
        %1218 = vmatprep.subr.mxu0 0.0
        %1219 = vmatpush1.msra.mxu0 0.0
        %1220 = vmatprep.subr.mxu0 0.0
        %1221 = vmatpush1.msra.mxu0 0.0
        %1222 = vmatprep.subr.mxu0 0.0
        %1223 = vmatpush1.msra.mxu0 0.0
        %1224 = vmatprep.subr.mxu0 0.0
        %1225 = vmatpush1.msra.mxu0 0.0
        %1226 = vmatprep.subr.mxu0 0.0
        %1227 = vmatpush1.msra.mxu0 0.0
        %1228 = vmatprep.subr.mxu0 0.0
        %1229 = vmatpush1.msra.mxu0 0.0
        %1230 = vmatprep.subr.mxu0 0.0
        %1231 = vmatpush1.msra.mxu0 0.0
        %1232 = vmatprep.subr.mxu0 0.0
        %1233 = vmatpush1.msra.mxu0 0.0
        %1234 = vmatprep.subr.mxu0 0.0
        %1235 = vmatpush1.msra.mxu0 0.0
        %1236 = vmatprep.subr.mxu0 0.0
        %1237 = vmatpush1.msra.mxu0 0.0
        %1238 = vmatprep.subr.mxu0 0.0
        %1239 = vmatpush1.msra.mxu0 0.0
        %1240 = vmatprep.subr.mxu0 0.0
        %1241 = vmatpush1.msra.mxu0 0.0
        %1242 = vmatprep.subr.mxu0 0.0
        %1243 = vmatpush1.msra.mxu0 0.0
        %1244 = vmatprep.subr.mxu0 0.0
        %1245 = vmatpush1.msra.mxu0 0.0
        %1246 = vmatprep.subr.mxu0 0.0
        %1247 = vmatpush1.msra.mxu0 0.0
        %1248 = vmatprep.subr.mxu0 0.0
        %1249 = vmatpush1.msra.mxu0 0.0
        %1250 = vmatprep.subr.mxu0 0.0
        %1251 = vmatpush1.msra.mxu0 0.0
        %1252 = vmatprep.subr.mxu0 0.0
        %1253 = vmatpush1.msra.mxu0 0.0
        %1254 = vmatprep.subr.mxu0 0.0
        %1255 = vmatpush1.msra.mxu0 0.0
        %1256 = vmatprep.subr.mxu0 0.0
        %1257 = vmatpush1.msra.mxu0 0.0
        %1258 = vmatprep.subr.mxu0 0.0
        %1259 = vmatpush1.msra.mxu0 0.0
        %1260 = vmatprep.subr.mxu0 0.0
        %1261 = vmatpush1.msra.mxu0 0.0
        %1262 = vmatprep.subr.mxu0 0.0
        %1263 = vmatpush1.msra.mxu0 0.0
        %1264 = vmatprep.subr.mxu0 0.0
        %1265 = vmatpush1.msra.mxu0 0.0
        %1266 = vmatprep.subr.mxu0 0.0
        %1267 = vmatpush1.msra.mxu0 0.0
        %1268 = vmatprep.mubr.f32.mxu0 0.0
        %1269 = vmatmul.mubr.f32.gmra.mrb[0].mxu0 %v1202
        %v1270 = vpop.f32.mrb[0].mxu0
        %v1271 = vadd.f32 0.0, %v1270
        %v1272 = vpop.f32.mrb[0].mxu0
        %1273 = vdwg.mxu0
        %v1274 = vld [vmem:[#allocation13 + $0x8] sm:$0xff]
        %v1276 = vsel %vm938, %v1271, 0
        %1278 = vmatprep.subr.mxu0 0.0
        %1279 = vmatpush1.msra.mxu0 %v1274
        %1280 = vmatprep.subr.mxu0 0.0
        %1281 = vmatpush1.msra.mxu0 0.0
        %1282 = vmatprep.subr.mxu0 0.0
        %1283 = vmatpush1.msra.mxu0 0.0
        %1284 = vmatprep.subr.mxu0 0.0
        %1285 = vmatpush1.msra.mxu0 0.0
        %1286 = vmatprep.subr.mxu0 0.0
        %1287 = vmatpush1.msra.mxu0 0.0
        %1288 = vmatprep.subr.mxu0 0.0
        %1289 = vmatpush1.msra.mxu0 0.0
        %1290 = vmatprep.subr.mxu0 0.0
        %1291 = vmatpush1.msra.mxu0 0.0
        %1292 = vmatprep.subr.mxu0 0.0
        %1293 = vmatpush1.msra.mxu0 0.0
        %1294 = vmatprep.subr.mxu0 0.0
        %1295 = vmatpush1.msra.mxu0 0.0
        %1296 = vmatprep.subr.mxu0 0.0
        %1297 = vmatpush1.msra.mxu0 0.0
        %1298 = vmatprep.subr.mxu0 0.0
        %1299 = vmatpush1.msra.mxu0 0.0
        %1300 = vmatprep.subr.mxu0 0.0
        %1301 = vmatpush1.msra.mxu0 0.0
        %1302 = vmatprep.subr.mxu0 0.0
        %1303 = vmatpush1.msra.mxu0 0.0
        %1304 = vmatprep.subr.mxu0 0.0
        %1305 = vmatpush1.msra.mxu0 0.0
        %1306 = vmatprep.subr.mxu0 0.0
        %1307 = vmatpush1.msra.mxu0 0.0
        %1308 = vmatprep.subr.mxu0 0.0
        %1309 = vmatpush1.msra.mxu0 0.0
        %1310 = vmatprep.subr.mxu0 0.0
        %1311 = vmatpush1.msra.mxu0 0.0
        %1312 = vmatprep.subr.mxu0 0.0
        %1313 = vmatpush1.msra.mxu0 0.0
        %1314 = vmatprep.subr.mxu0 0.0
        %1315 = vmatpush1.msra.mxu0 0.0
        %1316 = vmatprep.subr.mxu0 0.0
        %1317 = vmatpush1.msra.mxu0 0.0
        %1318 = vmatprep.subr.mxu0 0.0
        %1319 = vmatpush1.msra.mxu0 0.0
        %1320 = vmatprep.subr.mxu0 0.0
        %1321 = vmatpush1.msra.mxu0 0.0
        %1322 = vmatprep.subr.mxu0 0.0
        %1323 = vmatpush1.msra.mxu0 0.0
        %1324 = vmatprep.subr.mxu0 0.0
        %1325 = vmatpush1.msra.mxu0 0.0
        %1326 = vmatprep.subr.mxu0 0.0
        %1327 = vmatpush1.msra.mxu0 0.0
        %1328 = vmatprep.subr.mxu0 0.0
        %1329 = vmatpush1.msra.mxu0 0.0
        %1330 = vmatprep.subr.mxu0 0.0
        %1331 = vmatpush1.msra.mxu0 0.0
        %1332 = vmatprep.subr.mxu0 0.0
        %1333 = vmatpush1.msra.mxu0 0.0
        %1334 = vmatprep.subr.mxu0 0.0
        %1335 = vmatpush1.msra.mxu0 0.0
        %1336 = vmatprep.subr.mxu0 0.0
        %1337 = vmatpush1.msra.mxu0 0.0
        %1338 = vmatprep.subr.mxu0 0.0
        %1339 = vmatpush1.msra.mxu0 0.0
        %1340 = vmatprep.subr.mxu0 0.0
        %1341 = vmatpush1.msra.mxu0 0.0
        %1342 = vmatprep.mubr.f32.mxu0 0.0
        %1343 = vmatmul.mubr.f32.gmra.mrb[0].mxu0 %v1276
        %v1344 = vpop.f32.mrb[0].mxu0
        %v1345 = vadd.f32 0.0, %v1344
        %v1346 = vpop.f32.mrb[0].mxu0
        %1347 = vdwg.mxu0
        %v1349 = vsel %vm938, %v1100, 0
        %1351 = vmatprep.subr.mxu0 0.0
        %1352 = vmatpush1.msra.mxu0 %v1103
        %1353 = vmatprep.subr.mxu0 0.0
        %1354 = vmatpush1.msra.mxu0 0.0
        %1355 = vmatprep.subr.mxu0 0.0
        %1356 = vmatpush1.msra.mxu0 0.0
        %1357 = vmatprep.subr.mxu0 0.0
        %1358 = vmatpush1.msra.mxu0 0.0
        %1359 = vmatprep.subr.mxu0 0.0
        %1360 = vmatpush1.msra.mxu0 0.0
        %1361 = vmatprep.subr.mxu0 0.0
        %1362 = vmatpush1.msra.mxu0 0.0
        %1363 = vmatprep.subr.mxu0 0.0
        %1364 = vmatpush1.msra.mxu0 0.0
        %1365 = vmatprep.subr.mxu0 0.0
        %1366 = vmatpush1.msra.mxu0 0.0
        %1367 = vmatprep.subr.mxu0 0.0
        %1368 = vmatpush1.msra.mxu0 0.0
        %1369 = vmatprep.subr.mxu0 0.0
        %1370 = vmatpush1.msra.mxu0 0.0
        %1371 = vmatprep.subr.mxu0 0.0
        %1372 = vmatpush1.msra.mxu0 0.0
        %1373 = vmatprep.subr.mxu0 0.0
        %1374 = vmatpush1.msra.mxu0 0.0
        %1375 = vmatprep.subr.mxu0 0.0
        %1376 = vmatpush1.msra.mxu0 0.0
        %1377 = vmatprep.subr.mxu0 0.0
        %1378 = vmatpush1.msra.mxu0 0.0
        %1379 = vmatprep.subr.mxu0 0.0
        %1380 = vmatpush1.msra.mxu0 0.0
        %1381 = vmatprep.subr.mxu0 0.0
        %1382 = vmatpush1.msra.mxu0 0.0
        %1383 = vmatprep.subr.mxu0 0.0
        %1384 = vmatpush1.msra.mxu0 0.0
        %1385 = vmatprep.subr.mxu0 0.0
        %1386 = vmatpush1.msra.mxu0 0.0
        %1387 = vmatprep.subr.mxu0 0.0
        %1388 = vmatpush1.msra.mxu0 0.0
        %1389 = vmatprep.subr.mxu0 0.0
        %1390 = vmatpush1.msra.mxu0 0.0
        %1391 = vmatprep.subr.mxu0 0.0
        %1392 = vmatpush1.msra.mxu0 0.0
        %1393 = vmatprep.subr.mxu0 0.0
        %1394 = vmatpush1.msra.mxu0 0.0
        %1395 = vmatprep.subr.mxu0 0.0
        %1396 = vmatpush1.msra.mxu0 0.0
        %1397 = vmatprep.subr.mxu0 0.0
        %1398 = vmatpush1.msra.mxu0 0.0
        %1399 = vmatprep.subr.mxu0 0.0
        %1400 = vmatpush1.msra.mxu0 0.0
        %1401 = vmatprep.subr.mxu0 0.0
        %1402 = vmatpush1.msra.mxu0 0.0
        %1403 = vmatprep.subr.mxu0 0.0
        %1404 = vmatpush1.msra.mxu0 0.0
        %1405 = vmatprep.subr.mxu0 0.0
        %1406 = vmatpush1.msra.mxu0 0.0
        %1407 = vmatprep.subr.mxu0 0.0
        %1408 = vmatpush1.msra.mxu0 0.0
        %1409 = vmatprep.subr.mxu0 0.0
        %1410 = vmatpush1.msra.mxu0 0.0
        %1411 = vmatprep.subr.mxu0 0.0
        %1412 = vmatpush1.msra.mxu0 0.0
        %1413 = vmatprep.subr.mxu0 0.0
        %1414 = vmatpush1.msra.mxu0 0.0
        %1415 = vmatprep.mubr.f32.mxu0 0.0
        %1416 = vmatmul.mubr.f32.gmra.mrb[0].mxu0 %v1349
        %v1417 = vpop.f32.mrb[0].mxu0
        %v1418 = vadd.f32 %v1345, %v1417
        %v1419 = vpop.f32.mrb[0].mxu0
        %1420 = vdwg.mxu0
        %1421 = vrot.lane.b32.xlu0 %v860, 112
        %v1422 = vpop.permute.xlu0 %1421
        %1423 = vrot.lane.b32.xlu0 %v936, 112
        %v1424 = vpop.permute.xlu0 %1423
        %v1425 = vsel %vm938, %v1422, 0
        %v1427 = vsel %vm938, %v1424, 0
        %1429 = vmatprep.subr.mxu0 0.0
        %1430 = vmatpush1.xpose.msra.mxu0 %v1427
        %1431 = vmatprep.subr.mxu0 0.0
        %1432 = vmatpush1.xpose.msra.mxu0 0.0
        %1433 = vmatprep.subr.mxu0 0.0
        %1434 = vmatpush1.xpose.msra.mxu0 0.0
        %1435 = vmatprep.subr.mxu0 0.0
        %1436 = vmatpush1.xpose.msra.mxu0 0.0
        %1437 = vmatprep.subr.mxu0 0.0
        %1438 = vmatpush1.xpose.msra.mxu0 0.0
        %1439 = vmatprep.subr.mxu0 0.0
        %1440 = vmatpush1.xpose.msra.mxu0 0.0
        %1441 = vmatprep.subr.mxu0 0.0
        %1442 = vmatpush1.xpose.msra.mxu0 0.0
        %1443 = vmatprep.subr.mxu0 0.0
        %1444 = vmatpush1.xpose.msra.mxu0 0.0
        %1445 = vmatprep.subr.mxu0 0.0
        %1446 = vmatpush1.xpose.msra.mxu0 0.0
        %1447 = vmatprep.subr.mxu0 0.0
        %1448 = vmatpush1.xpose.msra.mxu0 0.0
        %1449 = vmatprep.subr.mxu0 0.0
        %1450 = vmatpush1.xpose.msra.mxu0 0.0
        %1451 = vmatprep.subr.mxu0 0.0
        %1452 = vmatpush1.xpose.msra.mxu0 0.0
        %1453 = vmatprep.subr.mxu0 0.0
        %1454 = vmatpush1.xpose.msra.mxu0 0.0
        %1455 = vmatprep.subr.mxu0 0.0
        %1456 = vmatpush1.xpose.msra.mxu0 0.0
        %1457 = vmatprep.subr.mxu0 0.0
        %1458 = vmatpush1.xpose.msra.mxu0 0.0
        %1459 = vmatprep.subr.mxu0 0.0
        %1460 = vmatpush1.xpose.msra.mxu0 0.0
        %1461 = vmatprep.subr.mxu0 0.0
        %1462 = vmatpush1.xpose.msra.mxu0 0.0
        %1463 = vmatprep.subr.mxu0 0.0
        %1464 = vmatpush1.xpose.msra.mxu0 0.0
        %1465 = vmatprep.subr.mxu0 0.0
        %1466 = vmatpush1.xpose.msra.mxu0 0.0
        %1467 = vmatprep.subr.mxu0 0.0
        %1468 = vmatpush1.xpose.msra.mxu0 0.0
        %1469 = vmatprep.subr.mxu0 0.0
        %1470 = vmatpush1.xpose.msra.mxu0 0.0
        %1471 = vmatprep.subr.mxu0 0.0
        %1472 = vmatpush1.xpose.msra.mxu0 0.0
        %1473 = vmatprep.subr.mxu0 0.0
        %1474 = vmatpush1.xpose.msra.mxu0 0.0
        %1475 = vmatprep.subr.mxu0 0.0
        %1476 = vmatpush1.xpose.msra.mxu0 0.0
        %1477 = vmatprep.subr.mxu0 0.0
        %1478 = vmatpush1.xpose.msra.mxu0 0.0
        %1479 = vmatprep.subr.mxu0 0.0
        %1480 = vmatpush1.xpose.msra.mxu0 0.0
        %1481 = vmatprep.subr.mxu0 0.0
        %1482 = vmatpush1.xpose.msra.mxu0 0.0
        %1483 = vmatprep.subr.mxu0 0.0
        %1484 = vmatpush1.xpose.msra.mxu0 0.0
        %1485 = vmatprep.subr.mxu0 0.0
        %1486 = vmatpush1.xpose.msra.mxu0 0.0
        %1487 = vmatprep.subr.mxu0 0.0
        %1488 = vmatpush1.xpose.msra.mxu0 0.0
        %1489 = vmatprep.subr.mxu0 0.0
        %1490 = vmatpush1.xpose.msra.mxu0 0.0
        %1491 = vmatprep.subr.mxu0 0.0
        %1492 = vmatpush1.xpose.msra.mxu0 0.0
        %1493 = vmatprep.mubr.f32.mxu0 0.0
        %1494 = vmatmul.mubr.f32.gmra.mrb[0].mxu0 %v1425
        %v1495 = vpop.f32.mrb[0].mxu0
        %v1496 = vadd.f32 0.0, %v1495
        %v1497 = vpop.f32.mrb[0].mxu0
        %1498 = vdwg.mxu0
        %v1499 = vmul.f32 %v1496, 0.35355338
        %v1500 = vsel %vm938, %v1499, -inf
        %1501 = vmax.xlane.f32.xlu0 %v1500
        %v1502 = vpop.xlane.xlu0 %1501
        %v1503 = vsub.f32 %v1499, %v1502
        %v1504 = vmul.f32 %v1503, 1.442695
        %v1505 = vpow.pop %v1504
        %v1506 = vsel %vm938, %v1505, 0.0
        %1507 = vadd.xlane.f32.xlu0 %v1506
        %v1508 = vpop.xlane.xlu0 %1507
        %v1509 = vrcp.pop %v1508
        %v1510 = vmul.f32 %v1508, %v1509
        %v1511 = vsub.f32 2.0, %v1510
        %v1512 = vmul.f32 %v1509, %v1511
        %v1513 = vmul.f32 %v1505, %v1512
        %1514 = vrot.lane.b32.xlu0 %v776, 112
        %v1515 = vpop.permute.xlu0 %1514
        %v1518 = vsel %vm938, %v1513, 0
        %1520 = vmatprep.subr.mxu0 0.0
        %1521 = vmatpush1.msra.mxu0 %v1515
        %1522 = vmatprep.subr.mxu0 0.0
        %1523 = vmatpush1.msra.mxu0 0.0
        %1524 = vmatprep.subr.mxu0 0.0
        %1525 = vmatpush1.msra.mxu0 0.0
        %1526 = vmatprep.subr.mxu0 0.0
        %1527 = vmatpush1.msra.mxu0 0.0
        %1528 = vmatprep.subr.mxu0 0.0
        %1529 = vmatpush1.msra.mxu0 0.0
        %1530 = vmatprep.subr.mxu0 0.0
        %1531 = vmatpush1.msra.mxu0 0.0
        %1532 = vmatprep.subr.mxu0 0.0
        %1533 = vmatpush1.msra.mxu0 0.0
        %1534 = vmatprep.subr.mxu0 0.0
        %1535 = vmatpush1.msra.mxu0 0.0
        %1536 = vmatprep.subr.mxu0 0.0
        %1537 = vmatpush1.msra.mxu0 0.0
        %1538 = vmatprep.subr.mxu0 0.0
        %1539 = vmatpush1.msra.mxu0 0.0
        %1540 = vmatprep.subr.mxu0 0.0
        %1541 = vmatpush1.msra.mxu0 0.0
        %1542 = vmatprep.subr.mxu0 0.0
        %1543 = vmatpush1.msra.mxu0 0.0
        %1544 = vmatprep.subr.mxu0 0.0
        %1545 = vmatpush1.msra.mxu0 0.0
        %1546 = vmatprep.subr.mxu0 0.0
        %1547 = vmatpush1.msra.mxu0 0.0
        %1548 = vmatprep.subr.mxu0 0.0
        %1549 = vmatpush1.msra.mxu0 0.0
        %1550 = vmatprep.subr.mxu0 0.0
        %1551 = vmatpush1.msra.mxu0 0.0
        %1552 = vmatprep.subr.mxu0 0.0
        %1553 = vmatpush1.msra.mxu0 0.0
        %1554 = vmatprep.subr.mxu0 0.0
        %1555 = vmatpush1.msra.mxu0 0.0
        %1556 = vmatprep.subr.mxu0 0.0
        %1557 = vmatpush1.msra.mxu0 0.0
        %1558 = vmatprep.subr.mxu0 0.0
        %1559 = vmatpush1.msra.mxu0 0.0
        %1560 = vmatprep.subr.mxu0 0.0
        %1561 = vmatpush1.msra.mxu0 0.0
        %1562 = vmatprep.subr.mxu0 0.0
        %1563 = vmatpush1.msra.mxu0 0.0
        %1564 = vmatprep.subr.mxu0 0.0
        %1565 = vmatpush1.msra.mxu0 0.0
        %1566 = vmatprep.subr.mxu0 0.0
        %1567 = vmatpush1.msra.mxu0 0.0
        %1568 = vmatprep.subr.mxu0 0.0
        %1569 = vmatpush1.msra.mxu0 0.0
        %1570 = vmatprep.subr.mxu0 0.0
        %1571 = vmatpush1.msra.mxu0 0.0
        %1572 = vmatprep.subr.mxu0 0.0
        %1573 = vmatpush1.msra.mxu0 0.0
        %1574 = vmatprep.subr.mxu0 0.0
        %1575 = vmatpush1.msra.mxu0 0.0
        %1576 = vmatprep.subr.mxu0 0.0
        %1577 = vmatpush1.msra.mxu0 0.0
        %1578 = vmatprep.subr.mxu0 0.0
        %1579 = vmatpush1.msra.mxu0 0.0
        %1580 = vmatprep.subr.mxu0 0.0
        %1581 = vmatpush1.msra.mxu0 0.0
        %1582 = vmatprep.subr.mxu0 0.0
        %1583 = vmatpush1.msra.mxu0 0.0
        %1584 = vmatprep.mubr.f32.mxu0 0.0
        %1585 = vmatmul.mubr.f32.gmra.mrb[0].mxu0 %v1518
        %v1586 = vpop.f32.mrb[0].mxu0
        %v1587 = vadd.f32 0.0, %v1586
        %v1588 = vpop.f32.mrb[0].mxu0
        %1589 = vdwg.mxu0
        %v1590 = vld [vmem:[#allocation13 + $0x10] sm:$0xff]
        %v1592 = vsel %vm938, %v1587, 0
        %1594 = vmatprep.subr.mxu0 0.0
        %1595 = vmatpush1.msra.mxu0 %v1590
        %1596 = vmatprep.subr.mxu0 0.0
        %1597 = vmatpush1.msra.mxu0 0.0
        %1598 = vmatprep.subr.mxu0 0.0
        %1599 = vmatpush1.msra.mxu0 0.0
        %1600 = vmatprep.subr.mxu0 0.0
        %1601 = vmatpush1.msra.mxu0 0.0
        %1602 = vmatprep.subr.mxu0 0.0
        %1603 = vmatpush1.msra.mxu0 0.0
        %1604 = vmatprep.subr.mxu0 0.0
        %1605 = vmatpush1.msra.mxu0 0.0
        %1606 = vmatprep.subr.mxu0 0.0
        %1607 = vmatpush1.msra.mxu0 0.0
        %1608 = vmatprep.subr.mxu0 0.0
        %1609 = vmatpush1.msra.mxu0 0.0
        %1610 = vmatprep.subr.mxu0 0.0
        %1611 = vmatpush1.msra.mxu0 0.0
        %1612 = vmatprep.subr.mxu0 0.0
        %1613 = vmatpush1.msra.mxu0 0.0
        %1614 = vmatprep.subr.mxu0 0.0
        %1615 = vmatpush1.msra.mxu0 0.0
        %1616 = vmatprep.subr.mxu0 0.0
        %1617 = vmatpush1.msra.mxu0 0.0
        %1618 = vmatprep.subr.mxu0 0.0
        %1619 = vmatpush1.msra.mxu0 0.0
        %1620 = vmatprep.subr.mxu0 0.0
        %1621 = vmatpush1.msra.mxu0 0.0
        %1622 = vmatprep.subr.mxu0 0.0
        %1623 = vmatpush1.msra.mxu0 0.0
        %1624 = vmatprep.subr.mxu0 0.0
        %1625 = vmatpush1.msra.mxu0 0.0
        %1626 = vmatprep.subr.mxu0 0.0
        %1627 = vmatpush1.msra.mxu0 0.0
        %1628 = vmatprep.subr.mxu0 0.0
        %1629 = vmatpush1.msra.mxu0 0.0
        %1630 = vmatprep.subr.mxu0 0.0
        %1631 = vmatpush1.msra.mxu0 0.0
        %1632 = vmatprep.subr.mxu0 0.0
        %1633 = vmatpush1.msra.mxu0 0.0
        %1634 = vmatprep.subr.mxu0 0.0
        %1635 = vmatpush1.msra.mxu0 0.0
        %1636 = vmatprep.subr.mxu0 0.0
        %1637 = vmatpush1.msra.mxu0 0.0
        %1638 = vmatprep.subr.mxu0 0.0
        %1639 = vmatpush1.msra.mxu0 0.0
        %1640 = vmatprep.subr.mxu0 0.0
        %1641 = vmatpush1.msra.mxu0 0.0
        %1642 = vmatprep.subr.mxu0 0.0
        %1643 = vmatpush1.msra.mxu0 0.0
        %1644 = vmatprep.subr.mxu0 0.0
        %1645 = vmatpush1.msra.mxu0 0.0
        %1646 = vmatprep.subr.mxu0 0.0
        %1647 = vmatpush1.msra.mxu0 0.0
        %1648 = vmatprep.subr.mxu0 0.0
        %1649 = vmatpush1.msra.mxu0 0.0
        %1650 = vmatprep.subr.mxu0 0.0
        %1651 = vmatpush1.msra.mxu0 0.0
        %1652 = vmatprep.subr.mxu0 0.0
        %1653 = vmatpush1.msra.mxu0 0.0
        %1654 = vmatprep.subr.mxu0 0.0
        %1655 = vmatpush1.msra.mxu0 0.0
        %1656 = vmatprep.subr.mxu0 0.0
        %1657 = vmatpush1.msra.mxu0 0.0
        %1658 = vmatprep.mubr.f32.mxu0 0.0
        %1659 = vmatmul.mubr.f32.gmra.mrb[0].mxu0 %v1592
        %v1660 = vpop.f32.mrb[0].mxu0
        %v1661 = vadd.f32 0.0, %v1660
        %v1662 = vpop.f32.mrb[0].mxu0
        %1663 = vdwg.mxu0
        %v1664 = vadd.f32 %v1418, %v1661
        %1665 = vrot.lane.b32.xlu0 %v860, 104
        %v1666 = vpop.permute.xlu0 %1665
        %1667 = vrot.lane.b32.xlu0 %v936, 104
        %v1668 = vpop.permute.xlu0 %1667
        %v1669 = vsel %vm938, %v1666, 0
        %v1671 = vsel %vm938, %v1668, 0
        %1673 = vmatprep.subr.mxu0 0.0
        %1674 = vmatpush1.xpose.msra.mxu0 %v1671
        %1675 = vmatprep.subr.mxu0 0.0
        %1676 = vmatpush1.xpose.msra.mxu0 0.0
        %1677 = vmatprep.subr.mxu0 0.0
        %1678 = vmatpush1.xpose.msra.mxu0 0.0
        %1679 = vmatprep.subr.mxu0 0.0
        %1680 = vmatpush1.xpose.msra.mxu0 0.0
        %1681 = vmatprep.subr.mxu0 0.0
        %1682 = vmatpush1.xpose.msra.mxu0 0.0
        %1683 = vmatprep.subr.mxu0 0.0
        %1684 = vmatpush1.xpose.msra.mxu0 0.0
        %1685 = vmatprep.subr.mxu0 0.0
        %1686 = vmatpush1.xpose.msra.mxu0 0.0
        %1687 = vmatprep.subr.mxu0 0.0
        %1688 = vmatpush1.xpose.msra.mxu0 0.0
        %1689 = vmatprep.subr.mxu0 0.0
        %1690 = vmatpush1.xpose.msra.mxu0 0.0
        %1691 = vmatprep.subr.mxu0 0.0
        %1692 = vmatpush1.xpose.msra.mxu0 0.0
        %1693 = vmatprep.subr.mxu0 0.0
        %1694 = vmatpush1.xpose.msra.mxu0 0.0
        %1695 = vmatprep.subr.mxu0 0.0
        %1696 = vmatpush1.xpose.msra.mxu0 0.0
        %1697 = vmatprep.subr.mxu0 0.0
        %1698 = vmatpush1.xpose.msra.mxu0 0.0
        %1699 = vmatprep.subr.mxu0 0.0
        %1700 = vmatpush1.xpose.msra.mxu0 0.0
        %1701 = vmatprep.subr.mxu0 0.0
        %1702 = vmatpush1.xpose.msra.mxu0 0.0
        %1703 = vmatprep.subr.mxu0 0.0
        %1704 = vmatpush1.xpose.msra.mxu0 0.0
        %1705 = vmatprep.subr.mxu0 0.0
        %1706 = vmatpush1.xpose.msra.mxu0 0.0
        %1707 = vmatprep.subr.mxu0 0.0
        %1708 = vmatpush1.xpose.msra.mxu0 0.0
        %1709 = vmatprep.subr.mxu0 0.0
        %1710 = vmatpush1.xpose.msra.mxu0 0.0
        %1711 = vmatprep.subr.mxu0 0.0
        %1712 = vmatpush1.xpose.msra.mxu0 0.0
        %1713 = vmatprep.subr.mxu0 0.0
        %1714 = vmatpush1.xpose.msra.mxu0 0.0
        %1715 = vmatprep.subr.mxu0 0.0
        %1716 = vmatpush1.xpose.msra.mxu0 0.0
        %1717 = vmatprep.subr.mxu0 0.0
        %1718 = vmatpush1.xpose.msra.mxu0 0.0
        %1719 = vmatprep.subr.mxu0 0.0
        %1720 = vmatpush1.xpose.msra.mxu0 0.0
        %1721 = vmatprep.subr.mxu0 0.0
        %1722 = vmatpush1.xpose.msra.mxu0 0.0
        %1723 = vmatprep.subr.mxu0 0.0
        %1724 = vmatpush1.xpose.msra.mxu0 0.0
        %1725 = vmatprep.subr.mxu0 0.0
        %1726 = vmatpush1.xpose.msra.mxu0 0.0
        %1727 = vmatprep.subr.mxu0 0.0
        %1728 = vmatpush1.xpose.msra.mxu0 0.0
        %1729 = vmatprep.subr.mxu0 0.0
        %1730 = vmatpush1.xpose.msra.mxu0 0.0
        %1731 = vmatprep.subr.mxu0 0.0
        %1732 = vmatpush1.xpose.msra.mxu0 0.0
        %1733 = vmatprep.subr.mxu0 0.0
        %1734 = vmatpush1.xpose.msra.mxu0 0.0
        %1735 = vmatprep.subr.mxu0 0.0
        %1736 = vmatpush1.xpose.msra.mxu0 0.0
        %1737 = vmatprep.mubr.f32.mxu0 0.0
        %1738 = vmatmul.mubr.f32.gmra.mrb[0].mxu0 %v1669
        %v1739 = vpop.f32.mrb[0].mxu0
        %v1740 = vadd.f32 0.0, %v1739
        %v1741 = vpop.f32.mrb[0].mxu0
        %1742 = vdwg.mxu0
        %v1743 = vmul.f32 %v1740, 0.35355338
        %v1744 = vsel %vm938, %v1743, -inf
        %1745 = vmax.xlane.f32.xlu0 %v1744
        %v1746 = vpop.xlane.xlu0 %1745
        %v1747 = vsub.f32 %v1743, %v1746
        %v1748 = vmul.f32 %v1747, 1.442695
        %v1749 = vpow.pop %v1748
        %v1750 = vsel %vm938, %v1749, 0.0
        %1751 = vadd.xlane.f32.xlu0 %v1750
        %v1752 = vpop.xlane.xlu0 %1751
        %v1753 = vrcp.pop %v1752
        %v1754 = vmul.f32 %v1752, %v1753
        %v1755 = vsub.f32 2.0, %v1754
        %v1756 = vmul.f32 %v1753, %v1755
        %v1757 = vmul.f32 %v1749, %v1756
        %1758 = vrot.lane.b32.xlu0 %v776, 104
        %v1759 = vpop.permute.xlu0 %1758
        %v1762 = vsel %vm938, %v1757, 0
        %1764 = vmatprep.subr.mxu0 0.0
        %1765 = vmatpush1.msra.mxu0 %v1759
        %1766 = vmatprep.subr.mxu0 0.0
        %1767 = vmatpush1.msra.mxu0 0.0
        %1768 = vmatprep.subr.mxu0 0.0
        %1769 = vmatpush1.msra.mxu0 0.0
        %1770 = vmatprep.subr.mxu0 0.0
        %1771 = vmatpush1.msra.mxu0 0.0
        %1772 = vmatprep.subr.mxu0 0.0
        %1773 = vmatpush1.msra.mxu0 0.0
        %1774 = vmatprep.subr.mxu0 0.0
        %1775 = vmatpush1.msra.mxu0 0.0
        %1776 = vmatprep.subr.mxu0 0.0
        %1777 = vmatpush1.msra.mxu0 0.0
        %1778 = vmatprep.subr.mxu0 0.0
        %1779 = vmatpush1.msra.mxu0 0.0
        %1780 = vmatprep.subr.mxu0 0.0
        %1781 = vmatpush1.msra.mxu0 0.0
        %1782 = vmatprep.subr.mxu0 0.0
        %1783 = vmatpush1.msra.mxu0 0.0
        %1784 = vmatprep.subr.mxu0 0.0
        %1785 = vmatpush1.msra.mxu0 0.0
        %1786 = vmatprep.subr.mxu0 0.0
        %1787 = vmatpush1.msra.mxu0 0.0
        %1788 = vmatprep.subr.mxu0 0.0
        %1789 = vmatpush1.msra.mxu0 0.0
        %1790 = vmatprep.subr.mxu0 0.0
        %1791 = vmatpush1.msra.mxu0 0.0
        %1792 = vmatprep.subr.mxu0 0.0
        %1793 = vmatpush1.msra.mxu0 0.0
        %1794 = vmatprep.subr.mxu0 0.0
        %1795 = vmatpush1.msra.mxu0 0.0
        %1796 = vmatprep.subr.mxu0 0.0
        %1797 = vmatpush1.msra.mxu0 0.0
        %1798 = vmatprep.subr.mxu0 0.0
        %1799 = vmatpush1.msra.mxu0 0.0
        %1800 = vmatprep.subr.mxu0 0.0
        %1801 = vmatpush1.msra.mxu0 0.0
        %1802 = vmatprep.subr.mxu0 0.0
        %1803 = vmatpush1.msra.mxu0 0.0
        %1804 = vmatprep.subr.mxu0 0.0
        %1805 = vmatpush1.msra.mxu0 0.0
        %1806 = vmatprep.subr.mxu0 0.0
        %1807 = vmatpush1.msra.mxu0 0.0
        %1808 = vmatprep.subr.mxu0 0.0
        %1809 = vmatpush1.msra.mxu0 0.0
        %1810 = vmatprep.subr.mxu0 0.0
        %1811 = vmatpush1.msra.mxu0 0.0
        %1812 = vmatprep.subr.mxu0 0.0
        %1813 = vmatpush1.msra.mxu0 0.0
        %1814 = vmatprep.subr.mxu0 0.0
        %1815 = vmatpush1.msra.mxu0 0.0
        %1816 = vmatprep.subr.mxu0 0.0
        %1817 = vmatpush1.msra.mxu0 0.0
        %1818 = vmatprep.subr.mxu0 0.0
        %1819 = vmatpush1.msra.mxu0 0.0
        %1820 = vmatprep.subr.mxu0 0.0
        %1821 = vmatpush1.msra.mxu0 0.0
        %1822 = vmatprep.subr.mxu0 0.0
        %1823 = vmatpush1.msra.mxu0 0.0
        %1824 = vmatprep.subr.mxu0 0.0
        %1825 = vmatpush1.msra.mxu0 0.0
        %1826 = vmatprep.subr.mxu0 0.0
        %1827 = vmatpush1.msra.mxu0 0.0
        %1828 = vmatprep.mubr.f32.mxu0 0.0
        %1829 = vmatmul.mubr.f32.gmra.mrb[0].mxu0 %v1762
        %v1830 = vpop.f32.mrb[0].mxu0
        %v1831 = vadd.f32 0.0, %v1830
        %v1832 = vpop.f32.mrb[0].mxu0
        %1833 = vdwg.mxu0
        %v1834 = vld [vmem:[#allocation13 + $0x18] sm:$0xff]
        %v1836 = vsel %vm938, %v1831, 0
        %1838 = vmatprep.subr.mxu0 0.0
        %1839 = vmatpush1.msra.mxu0 %v1834
        %1840 = vmatprep.subr.mxu0 0.0
        %1841 = vmatpush1.msra.mxu0 0.0
        %1842 = vmatprep.subr.mxu0 0.0
        %1843 = vmatpush1.msra.mxu0 0.0
        %1844 = vmatprep.subr.mxu0 0.0
        %1845 = vmatpush1.msra.mxu0 0.0
        %1846 = vmatprep.subr.mxu0 0.0
        %1847 = vmatpush1.msra.mxu0 0.0
        %1848 = vmatprep.subr.mxu0 0.0
        %1849 = vmatpush1.msra.mxu0 0.0
        %1850 = vmatprep.subr.mxu0 0.0
        %1851 = vmatpush1.msra.mxu0 0.0
        %1852 = vmatprep.subr.mxu0 0.0
        %1853 = vmatpush1.msra.mxu0 0.0
        %1854 = vmatprep.subr.mxu0 0.0
        %1855 = vmatpush1.msra.mxu0 0.0
        %1856 = vmatprep.subr.mxu0 0.0
        %1857 = vmatpush1.msra.mxu0 0.0
        %1858 = vmatprep.subr.mxu0 0.0
        %1859 = vmatpush1.msra.mxu0 0.0
        %1860 = vmatprep.subr.mxu0 0.0
        %1861 = vmatpush1.msra.mxu0 0.0
        %1862 = vmatprep.subr.mxu0 0.0
        %1863 = vmatpush1.msra.mxu0 0.0
        %1864 = vmatprep.subr.mxu0 0.0
        %1865 = vmatpush1.msra.mxu0 0.0
        %1866 = vmatprep.subr.mxu0 0.0
        %1867 = vmatpush1.msra.mxu0 0.0
        %1868 = vmatprep.subr.mxu0 0.0
        %1869 = vmatpush1.msra.mxu0 0.0
        %1870 = vmatprep.subr.mxu0 0.0
        %1871 = vmatpush1.msra.mxu0 0.0
        %1872 = vmatprep.subr.mxu0 0.0
        %1873 = vmatpush1.msra.mxu0 0.0
        %1874 = vmatprep.subr.mxu0 0.0
        %1875 = vmatpush1.msra.mxu0 0.0
        %1876 = vmatprep.subr.mxu0 0.0
        %1877 = vmatpush1.msra.mxu0 0.0
        %1878 = vmatprep.subr.mxu0 0.0
        %1879 = vmatpush1.msra.mxu0 0.0
        %1880 = vmatprep.subr.mxu0 0.0
        %1881 = vmatpush1.msra.mxu0 0.0
        %1882 = vmatprep.subr.mxu0 0.0
        %1883 = vmatpush1.msra.mxu0 0.0
        %1884 = vmatprep.subr.mxu0 0.0
        %1885 = vmatpush1.msra.mxu0 0.0
        %1886 = vmatprep.subr.mxu0 0.0
        %1887 = vmatpush1.msra.mxu0 0.0
        %1888 = vmatprep.subr.mxu0 0.0
        %1889 = vmatpush1.msra.mxu0 0.0
        %1890 = vmatprep.subr.mxu0 0.0
        %1891 = vmatpush1.msra.mxu0 0.0
        %1892 = vmatprep.subr.mxu0 0.0
        %1893 = vmatpush1.msra.mxu0 0.0
        %1894 = vmatprep.subr.mxu0 0.0
        %1895 = vmatpush1.msra.mxu0 0.0
        %1896 = vmatprep.subr.mxu0 0.0
        %1897 = vmatpush1.msra.mxu0 0.0
        %1898 = vmatprep.subr.mxu0 0.0
        %1899 = vmatpush1.msra.mxu0 0.0
        %1900 = vmatprep.subr.mxu0 0.0
        %1901 = vmatpush1.msra.mxu0 0.0
        %1902 = vmatprep.mubr.f32.mxu0 0.0
        %1903 = vmatmul.mubr.f32.gmra.mrb[0].mxu0 %v1836
        %v1904 = vpop.f32.mrb[0].mxu0
        %v1905 = vadd.f32 0.0, %v1904
        %v1906 = vpop.f32.mrb[0].mxu0
        %1907 = vdwg.mxu0
        %v1908 = vadd.f32 %v1664, %v1905
        %v1910 = vlaneseq
        %v1911 = vshrl.u32 %v1910, 7
        %v1912 = vsub.s32 0, %v1911
        %v1913 = vrot.slane %v937, %v1912
        %v1915 = vadd.f32 %v1908, %v1913
        %1916 = vst.msk [vmem:[%s543] sm:$0xff] %vm551, %v1915
        %s1917 = sand.u32 %s288, 1
        %s1918 = scalar_lea.sflag [#allocation4], %s1917
        %s1919 = sand.u32 %s288, 1
        %s1920 = smul.addr %s1919, 8
        %s1921 = scalar_lea.vmem [#allocation16], %s1920
        // Predicated region
        $region97: #{multi_head_attention_block.1} parent=63 // pred_check
          %p1922 = pneg %p298
        $region98: #{multi_head_attention_block.1} parent=63 // pred_check_branch
          %1924 = sbr.rel (%p1922) target = $region100
        $region99: #{multi_head_attention_block.1} parent=63 // pred_region
          %s1926 = ssub.s32 128, 128
          %1927 = vsyncadd %s1918, %s1926
          %s1928 = smul.addr %s34, 128
          %s1929 = scalar_lea.hbm %s11, %s1928
          %s1931 = sshll.u32 %s1921, 4
          %s1932 = int_to_ptr.vmem [resolvable:$true] %s1931
          %1934 = dma.vmem_to_hbm [thread:$0]  %s1932, 128, %s1929, %s1918
        $region100: #{multi_head_attention_block.1} parent=63 // pred_fallthru
          _
      $region64: #{multi_head_attention_block.1} parent=5 // pred_fallthru
        _
      %p1935 = scmp.le.s32.totalorder 2, %s29
      // Predicated region
      $region101: #{multi_head_attention_block.1} parent=5 // pred_check
        %p1936 = pneg %p1935
      $region102: #{multi_head_attention_block.1} parent=5 // pred_check_branch
        %1938 = sbr.rel (%p1936) target = $region104
      $region103: #{multi_head_attention_block.1} parent=5 // pred_region
        %s1939 = ssub.s32 %s29, 2
        // Predicated region
        $region105: #{multi_head_attention_block.1} parent=103 // pred_check
          %p1940 = pneg %p304
        $region106: #{multi_head_attention_block.1} parent=103 // pred_check_branch
          %1942 = sbr.rel (%p1940) target = $region108
        $region107: #{multi_head_attention_block.1} parent=103 // pred_region
          %s1943 = sand.u32 %s289, 1
          %s1944 = scalar_lea.sflag [#allocation4], %s1943
          %s1945 = sand.u32 %s289, 1
          %s1946 = smul.addr %s1945, 8
          %s1947 = scalar_lea.vmem [#allocation16], %s1946
          %1948 = dma.done %s1944, 128
        $region108: #{multi_head_attention_block.1} parent=103 // pred_fallthru
          _
      $region104: #{multi_head_attention_block.1} parent=5 // pred_fallthru
        _
    $region6: #{multi_head_attention_block.1} parent=1 // loop_footer
      %s33 = sadd.s32 1, %s29
    $region7: #{multi_head_attention_block.1} parent=1 // loop_footer_branch
      %28 = sbr.rel target = $region3
    $region8: #{multi_head_attention_block.1} parent=1 // loop_exit
      _
    %1949 = vsyncpa [#allocation3], 1
    %s1950 = scalar_lea.sflag [#allocation3], 1
    %1951 = vsyncpa %s1950, 1
    %1952 = vsyncpa [#allocation6], 1
    %s1953 = scalar_lea.sflag [#allocation6], 1
    %1954 = vsyncpa %s1953, 1
    %1955 = vsyncpa [#allocation9], 1
    %1956 = vsyncpa [#allocation12], 1
    %1957 = vsyncpa [#allocation15], 1
    %1958 = vsyncpa [#allocation4], 1
    %s1959 = scalar_lea.sflag [#allocation4], 1
    %1960 = vsyncpa %s1959, 1

</llo_original>
